<compile_context>
chip_gen: v7x
topology: tpu7x:2x2x1
jax: 0.10.0
libtpu: 0.0.40
codegen_flags: <defaults>
</compile_context>

<pallas_src>
import jax
import jax.numpy as jnp
from jax.experimental import pallas as pl
from jax.experimental.pallas import tpu as pltpu


def decoder_kernel(ids_ref,                 # SMEM (T, B) int32  (scalar prefetch)
                   emb_hbm,                 # HBM  (V, E) f32    (memory_space=ANY)
                   h0_ref, c0_ref,          # VMEM (B, H) f32
                   wih_ref, whh_ref,        # VMEM (E, 4H) / (H, 4H) bf16
                   b_ref,                   # VMEM (1, 4H) f32   (b_ih + b_hh)
                   wfc_ref, bfc_ref,        # VMEM (H, TN) bf16 / (1, TN) f32
                   pred_ref,                # VMEM (1, B, TN) f32   out tile
                   h_out_ref, c_out_ref,    # VMEM (B, H) f32       out (resident)
                   x_buf, gather_sem, h_scr, c_scr):
    t = pl.program_id(0)          # timestep (recurrent -> "arbitrary")
    j = pl.program_id(1)          # vocab tile of the FC projection
    H = h0_ref.shape[1]
    B = x_buf.shape[0]

    # ---- LSTM cell: run once per timestep (on the first vocab tile) --------
    @pl.when(j == 0)
    def _lstm_step():
        @pl.when(t == 0)
        def _init_state():
            h_scr[...] = h0_ref[...]
            c_scr[...] = c0_ref[...]

        # Embedding gather: per-row DMA from the HBM table, driven by SMEM ids.
        copies = []
        for bb in range(B):                      # B is small; static unroll
            cp = pltpu.make_async_copy(
                emb_hbm.at[pl.ds(ids_ref[t, bb], 1)],   # (1, E) row in HBM
                x_buf.at[pl.ds(bb, 1)],                 # (1, E) row in VMEM
                gather_sem.at[bb])
            cp.start()
            copies.append(cp)
        for cp in copies:
            cp.wait()

        x = x_buf[...].astype(jnp.bfloat16)             # (B, E)
        h_prev = h_scr[...].astype(jnp.bfloat16)        # (B, H)

        # PyTorch gate order [i, f, g, o]; bf16 operands, f32 accumulation.
        gates = (jnp.dot(x, wih_ref[...], preferred_element_type=jnp.float32)
                 + jnp.dot(h_prev, whh_ref[...],
                           preferred_element_type=jnp.float32)
                 + b_ref[...])                          # (B, 4H) f32

        # With H a multiple of 128 these slices are lane-aligned vreg views.
        i_g = jax.nn.sigmoid(gates[:, 0 * H:1 * H])
        f_g = jax.nn.sigmoid(gates[:, 1 * H:2 * H])
        g_g = jnp.tanh(gates[:, 2 * H:3 * H])
        o_g = jax.nn.sigmoid(gates[:, 3 * H:4 * H])

        c_new = f_g * c_scr[...] + i_g * g_g
        h_new = o_g * jnp.tanh(c_new)
        h_scr[...] = h_new
        c_scr[...] = c_new
        h_out_ref[...] = h_new       # resident output block -> written back once
        c_out_ref[...] = c_new

    # ---- FC projection, one lane-dense vocab tile per grid step ------------
    pred_ref[0] = (jnp.dot(h_scr[...].astype(jnp.bfloat16), wfc_ref[...],
                           preferred_element_type=jnp.float32)
                   + bfc_ref[...])


def decoder_forward_steps(ids_seq, hidden, cell, params, *, tn=256):
    """Fused multi-step decode.

    ids_seq: (T, B) int32, hidden/cell: (1, B, H) f32.
    Returns (preds (T, B, V) f32, hidden (1, B, H), cell (1, B, H)).
    Each step t is exactly Decoder.forward(ids_seq[t], hidden, cell).
    """
    emb, wih_t, whh_t, b, wfc_t, bfc = params
    T, B = ids_seq.shape
    V, E = emb.shape
    H = hidden.shape[-1]
    assert tn % 128 == 0 and V % tn == 0, "FC tile must be a 128-multiple dividing V"
    n_j = V // tn

    ids_seq = ids_seq.astype(jnp.int32)
    h0 = hidden[0].astype(jnp.float32)   # num_layers == 1
    c0 = cell[0].astype(jnp.float32)

    def resident(shape):
        # Constant block index across the whole grid -> DMA'd once, stays in VMEM.
        return pl.BlockSpec(shape, lambda t, j, ids: (0,) * len(shape))

    grid_spec = pltpu.PrefetchScalarGridSpec(
        num_scalar_prefetch=1,                 # ids_seq -> SMEM
        grid=(T, n_j),
        in_specs=[
            pl.BlockSpec(memory_space=pl.ANY),                     # emb in HBM
            resident((B, H)),                                      # h0
            resident((B, H)),                                      # c0
            resident((E, 4 * H)),                                  # W_ih^T (bf16)
            resident((H, 4 * H)),                                  # W_hh^T (bf16)
            resident((1, 4 * H)),                                  # bias
            pl.BlockSpec((H, tn), lambda t, j, ids: (0, j)),       # W_fc^T tile
            pl.BlockSpec((1, tn), lambda t, j, ids: (0, j)),       # b_fc tile
        ],
        out_specs=[
            pl.BlockSpec((1, B, tn), lambda t, j, ids: (t, 0, j)),  # pred tile
            resident((B, H)),                                       # h_out
            resident((B, H)),                                       # c_out
        ],
        scratch_shapes=[
            pltpu.VMEM((B, E), jnp.float32),     # gathered embedding rows
            pltpu.SemaphoreType.DMA((B,)),       # per-row gather semaphores
            pltpu.VMEM((B, H), jnp.float32),     # h carried across timesteps
            pltpu.VMEM((B, H), jnp.float32),     # c carried across timesteps
        ],
    )

    preds, h_new, c_new = pl.pallas_call(
        decoder_kernel,
        grid_spec=grid_spec,
        out_shape=(
            jax.ShapeDtypeStruct((T, B, V), jnp.float32),
            jax.ShapeDtypeStruct((B, H), jnp.float32),
            jax.ShapeDtypeStruct((B, H), jnp.float32),
        ),
        compiler_params=pltpu.CompilerParams(
            # Timestep axis is recurrent; vocab axis reuses h/c scratch written
            # at j == 0, so both must stay on one core ("arbitrary").
            dimension_semantics=("arbitrary", "arbitrary")),
    )(ids_seq, emb, h0, c0, wih_t, whh_t, b, wfc_t, bfc)

    return preds, h_new[None], c_new[None]


def decoder_forward(ids, hidden, cell, params, *, tn=256):
    """Exact Decoder.forward semantics: ids (B,), hidden/cell (1, B, H)."""
    preds, h_new, c_new = decoder_forward_steps(ids[None, :], hidden, cell,
                                                params, tn=tn)
    return preds[0], h_new, c_new


def init_params(key, output_size, embedding_dim, hidden_dim):
    ks = jax.random.split(key, 7)
    V, E, H = output_size, embedding_dim, hidden_dim
    s = 1.0 / jnp.sqrt(H)
    emb = jax.random.normal(ks[0], (V, E), jnp.float32)            # embedding table
    wih = jax.random.uniform(ks[1], (4 * H, E), jnp.float32, -s, s)
    whh = jax.random.uniform(ks[2], (4 * H, H), jnp.float32, -s, s)
    b_ih = jax.random.uniform(ks[3], (4 * H,), jnp.float32, -s, s)
    b_hh = jax.random.uniform(ks[4], (4 * H,), jnp.float32, -s, s)
    wfc = jax.random.uniform(ks[5], (V, H), jnp.float32, -s, s)
    bfc = jax.random.uniform(ks[6], (V,), jnp.float32, -s, s)
    return (emb,
            wih.T.astype(jnp.bfloat16),        # (E, 4H)
            whh.T.astype(jnp.bfloat16),        # (H, 4H)
            (b_ih + b_hh)[None, :],            # (1, 4H) f32
            wfc.T.astype(jnp.bfloat16),        # (H, V)
            bfc[None, :])                      # (1, V) f32


def reference_forward_steps(ids_seq, hidden, cell, params):
    """Pure-JAX reference mirroring the kernel numerics (bf16 weights, f32 acc)."""
    emb, wih_t, whh_t, b, wfc_t, bfc = params
    H = hidden.shape[-1]
    h, c = hidden[0], cell[0]
    preds = []
    for t in range(ids_seq.shape[0]):
        x = emb[ids_seq[t]].astype(jnp.bfloat16)
        gates = (jnp.dot(x, wih_t, preferred_element_type=jnp.float32)
                 + jnp.dot(h.astype(jnp.bfloat16), whh_t,
                           preferred_element_type=jnp.float32)
                 + b)
        i_g = jax.nn.sigmoid(gates[:, :H])
        f_g = jax.nn.sigmoid(gates[:, H:2 * H])
        g_g = jnp.tanh(gates[:, 2 * H:3 * H])
        o_g = jax.nn.sigmoid(gates[:, 3 * H:])
        c = f_g * c + i_g * g_g
        h = o_g * jnp.tanh(c)
        preds.append(jnp.dot(h.astype(jnp.bfloat16), wfc_t,
                             preferred_element_type=jnp.float32) + bfc)
    return jnp.stack(preds), h[None], c[None]


if __name__ == "__main__":
    # Small shapes consistent with the module (vocab tiled by 128, H lane-aligned).
    B, V, E, H, T = 8, 512, 64, 128, 4

    key = jax.random.PRNGKey(0)
    k_ids, k_h, k_c, k_p = jax.random.split(key, 4)

    ids_seq = jax.random.randint(k_ids, (T, B), 0, V, dtype=jnp.int32)
    hidden = jax.random.normal(k_h, (1, B, H), jnp.float32)
    cell = jax.random.normal(k_c, (1, B, H), jnp.float32)
    params = init_params(k_p, V, E, H)

    # Single step == exact PyTorch Decoder.forward semantics.
    pred, h1, c1 = decoder_forward(ids_seq[0], hidden, cell, params, tn=128)
    # Fused multi-step decode: T steps, weights resident, h/c carried in VMEM.
    preds, hT, cT = decoder_forward_steps(ids_seq, hidden, cell, params, tn=128)
    jax.block_until_ready((pred, h1, c1, preds, hT, cT))

    # Correctness checks (bf16 weights -> slightly loosened tolerances).
    pred_r1, h_r1, c_r1 = reference_forward_steps(ids_seq[:1], hidden, cell, params)
    assert jnp.allclose(pred, pred_r1[0], atol=2e-2, rtol=2e-2)
    assert jnp.allclose(h1, h_r1, atol=1e-2, rtol=1e-2)
    assert jnp.allclose(c1, c_r1, atol=1e-2, rtol=1e-2)

    preds_r, h_rT, c_rT = reference_forward_steps(ids_seq, hidden, cell, params)
    assert jnp.allclose(preds, preds_r, atol=2e-2, rtol=2e-2)
    assert jnp.allclose(hT, h_rT, atol=1e-2, rtol=1e-2)
    assert jnp.allclose(cT, c_rT, atol=1e-2, rtol=1e-2)

    print("KERNEL_OK")
</pallas_src>

<mosaic_0001>
module attributes {stable_mosaic.version = 11 : i64} {
  func.func @decoder_kernel(%arg0: i32, %arg1: i32, %arg2: memref<1x8xi32, #tpu.memory_space<smem>>, %arg3: memref<512x64xf32, #tpu.memory_space<any>>, %arg4: memref<8x128xf32, #tpu.memory_space<vmem>>, %arg5: memref<8x128xf32, #tpu.memory_space<vmem>>, %arg6: memref<64x512xbf16, #tpu.memory_space<vmem>>, %arg7: memref<128x512xbf16, #tpu.memory_space<vmem>>, %arg8: memref<1x512xf32, #tpu.memory_space<vmem>>, %arg9: memref<128x128xbf16, #tpu.memory_space<vmem>>, %arg10: memref<1x128xf32, #tpu.memory_space<vmem>>, %arg11: memref<1x8x128xf32, #tpu.memory_space<vmem>>, %arg12: memref<8x128xf32, #tpu.memory_space<vmem>>, %arg13: memref<8x128xf32, #tpu.memory_space<vmem>>, %arg14: memref<8x64xf32, #tpu.memory_space<vmem>>, %arg15: memref<8x!tpu.dma_semaphore, #tpu.memory_space<semaphore_mem>>, %arg16: memref<8x128xf32, #tpu.memory_space<vmem>>, %arg17: memref<8x128xf32, #tpu.memory_space<vmem>>) attributes {dimension_semantics = [#tpu.dimension_semantics<arbitrary>, #tpu.dimension_semantics<arbitrary>], iteration_bounds = array<i64: 1, 4>, scalar_prefetch = 1 : i64, scratch_operands = 4 : i64, tpu.core_type = #tpu.core_type<tc>, window_params = [{}, {pipeline_mode = #tpu.pipeline_mode<synchronous>, transform_indices = @transform_1, window_bounds = array<i64: 8, 128>}, {pipeline_mode = #tpu.pipeline_mode<synchronous>, transform_indices = @transform_2, window_bounds = array<i64: 8, 128>}, {pipeline_mode = #tpu.pipeline_mode<synchronous>, transform_indices = @transform_3, window_bounds = array<i64: 64, 512>}, {pipeline_mode = #tpu.pipeline_mode<synchronous>, transform_indices = @transform_4, window_bounds = array<i64: 128, 512>}, {pipeline_mode = #tpu.pipeline_mode<synchronous>, transform_indices = @transform_5, window_bounds = array<i64: 1, 512>}, {transform_indices = @transform_6, window_bounds = array<i64: 128, 128>}, {transform_indices = @transform_7, window_bounds = array<i64: 1, 128>}, {transform_indices = @transform_8, window_bounds = array<i64: 1, 8, 128>}, {pipeline_mode = #tpu.pipeline_mode<synchronous>, transform_indices = @transform_9, window_bounds = array<i64: 8, 128>}, {pipeline_mode = #tpu.pipeline_mode<synchronous>, transform_indices = @transform_10, window_bounds = array<i64: 8, 128>}]} {
    %c0_i32 = arith.constant 0 : i32
    %0 = arith.cmpi eq, %arg1, %c0_i32 : i32
    %1 = arith.extui %0 : i1 to i32
    %c0_i32_0 = arith.constant 0 : i32
    %2 = arith.cmpi ne, %1, %c0_i32_0 : i32
    scf.if %2 {
      %c0_i32_9 = arith.constant 0 : i32
      %13 = arith.cmpi eq, %arg0, %c0_i32_9 : i32
      %14 = arith.extui %13 : i1 to i32
      %c0_i32_10 = arith.constant 0 : i32
      %15 = arith.cmpi ne, %14, %c0_i32_10 : i32
      scf.if %15 {
        %c0_94 = arith.constant 0 : index
        %c0_95 = arith.constant 0 : index
        %138 = vector.load %arg4[%c0_94, %c0_95] : memref<8x128xf32, #tpu.memory_space<vmem>>, vector<8x128xf32>
        %c0_96 = arith.constant 0 : index
        %c0_97 = arith.constant 0 : index
        %139 = vector.load %arg16[%c0_96, %c0_97] : memref<8x128xf32, #tpu.memory_space<vmem>>, vector<8x128xf32>
        tpu.vector_store %arg16[%c0_96, %c0_97], %138 {strides = array<i32>} : memref<8x128xf32, #tpu.memory_space<vmem>>, vector<8x128xf32>,
        %c0_98 = arith.constant 0 : index
        %c0_99 = arith.constant 0 : index
        %140 = vector.load %arg5[%c0_98, %c0_99] : memref<8x128xf32, #tpu.memory_space<vmem>>, vector<8x128xf32>
        %c0_100 = arith.constant 0 : index
        %c0_101 = arith.constant 0 : index
        %141 = vector.load %arg17[%c0_100, %c0_101] : memref<8x128xf32, #tpu.memory_space<vmem>>, vector<8x128xf32>
        tpu.vector_store %arg17[%c0_100, %c0_101], %140 {strides = array<i32>} : memref<8x128xf32, #tpu.memory_space<vmem>>, vector<8x128xf32>,
      } else {
      }
      %16 = arith.index_cast %arg0 : i32 to index
      %c0_11 = arith.constant 0 : index
      %17 = memref.load %arg2[%16, %c0_11] : memref<1x8xi32, #tpu.memory_space<smem>>
      %c0_i32_12 = arith.constant 0 : i32
      %c0_i32_13 = arith.constant 0 : i32
      %18 = tpu.memref_slice %arg3[%17, %c0_i32_13] : memref<512x64xf32, #tpu.memory_space<any>> -> memref<1x64xf32, #tpu.memory_space<any>>
      %c0_i32_14 = arith.constant 0 : i32
      %c0_i32_15 = arith.constant 0 : i32
      %19 = tpu.memref_slice %arg14[%c0_i32_14, %c0_i32_15] : memref<8x64xf32, #tpu.memory_space<vmem>> -> memref<1x64xf32, #tpu.memory_space<vmem>>
      %20 = tpu.memref_slice %arg15[%c0_i32_12] : memref<8x!tpu.dma_semaphore, #tpu.memory_space<semaphore_mem>> -> memref<1x!tpu.dma_semaphore, #tpu.memory_space<semaphore_mem>>
      %21 = tpu.memref_squeeze %20 : memref<1x!tpu.dma_semaphore, #tpu.memory_space<semaphore_mem>> -> memref<!tpu.dma_semaphore, #tpu.memory_space<semaphore_mem>>
      tpu.enqueue_dma source(%18 : memref<1x64xf32, #tpu.memory_space<any>>) target(%19 : memref<1x64xf32, #tpu.memory_space<vmem>>) target_semaphore(%21 : memref<!tpu.dma_semaphore, #tpu.memory_space<semaphore_mem>>)
      %22 = arith.index_cast %arg0 : i32 to index
      %c1 = arith.constant 1 : index
      %23 = memref.load %arg2[%22, %c1] : memref<1x8xi32, #tpu.memory_space<smem>>
      %c1_i32 = arith.constant 1 : i32
      %c0_i32_16 = arith.constant 0 : i32
      %24 = tpu.memref_slice %arg3[%23, %c0_i32_16] : memref<512x64xf32, #tpu.memory_space<any>> -> memref<1x64xf32, #tpu.memory_space<any>>
      %c1_i32_17 = arith.constant 1 : i32
      %c0_i32_18 = arith.constant 0 : i32
      %25 = tpu.memref_slice %arg14[%c1_i32_17, %c0_i32_18] : memref<8x64xf32, #tpu.memory_space<vmem>> -> memref<1x64xf32, #tpu.memory_space<vmem>>
      %26 = tpu.memref_slice %arg15[%c1_i32] : memref<8x!tpu.dma_semaphore, #tpu.memory_space<semaphore_mem>> -> memref<1x!tpu.dma_semaphore, #tpu.memory_space<semaphore_mem>>
      %27 = tpu.memref_squeeze %26 : memref<1x!tpu.dma_semaphore, #tpu.memory_space<semaphore_mem>> -> memref<!tpu.dma_semaphore, #tpu.memory_space<semaphore_mem>>
      tpu.enqueue_dma source(%24 : memref<1x64xf32, #tpu.memory_space<any>>) target(%25 : memref<1x64xf32, #tpu.memory_space<vmem>>) target_semaphore(%27 : memref<!tpu.dma_semaphore, #tpu.memory_space<semaphore_mem>>)
      %28 = arith.index_cast %arg0 : i32 to index
      %c2 = arith.constant 2 : index
      %29 = memref.load %arg2[%28, %c2] : memref<1x8xi32, #tpu.memory_space<smem>>
      %c2_i32 = arith.constant 2 : i32
      %c0_i32_19 = arith.constant 0 : i32
      %30 = tpu.memref_slice %arg3[%29, %c0_i32_19] : memref<512x64xf32, #tpu.memory_space<any>> -> memref<1x64xf32, #tpu.memory_space<any>>
      %c2_i32_20 = arith.constant 2 : i32
      %c0_i32_21 = arith.constant 0 : i32
      %31 = tpu.memref_slice %arg14[%c2_i32_20, %c0_i32_21] : memref<8x64xf32, #tpu.memory_space<vmem>> -> memref<1x64xf32, #tpu.memory_space<vmem>>
      %32 = tpu.memref_slice %arg15[%c2_i32] : memref<8x!tpu.dma_semaphore, #tpu.memory_space<semaphore_mem>> -> memref<1x!tpu.dma_semaphore, #tpu.memory_space<semaphore_mem>>
      %33 = tpu.memref_squeeze %32 : memref<1x!tpu.dma_semaphore, #tpu.memory_space<semaphore_mem>> -> memref<!tpu.dma_semaphore, #tpu.memory_space<semaphore_mem>>
      tpu.enqueue_dma source(%30 : memref<1x64xf32, #tpu.memory_space<any>>) target(%31 : memref<1x64xf32, #tpu.memory_space<vmem>>) target_semaphore(%33 : memref<!tpu.dma_semaphore, #tpu.memory_space<semaphore_mem>>)
      %34 = arith.index_cast %arg0 : i32 to index
      %c3 = arith.constant 3 : index
      %35 = memref.load %arg2[%34, %c3] : memref<1x8xi32, #tpu.memory_space<smem>>
      %c3_i32 = arith.constant 3 : i32
      %c0_i32_22 = arith.constant 0 : i32
      %36 = tpu.memref_slice %arg3[%35, %c0_i32_22] : memref<512x64xf32, #tpu.memory_space<any>> -> memref<1x64xf32, #tpu.memory_space<any>>
      %c3_i32_23 = arith.constant 3 : i32
      %c0_i32_24 = arith.constant 0 : i32
      %37 = tpu.memref_slice %arg14[%c3_i32_23, %c0_i32_24] : memref<8x64xf32, #tpu.memory_space<vmem>> -> memref<1x64xf32, #tpu.memory_space<vmem>>
      %38 = tpu.memref_slice %arg15[%c3_i32] : memref<8x!tpu.dma_semaphore, #tpu.memory_space<semaphore_mem>> -> memref<1x!tpu.dma_semaphore, #tpu.memory_space<semaphore_mem>>
      %39 = tpu.memref_squeeze %38 : memref<1x!tpu.dma_semaphore, #tpu.memory_space<semaphore_mem>> -> memref<!tpu.dma_semaphore, #tpu.memory_space<semaphore_mem>>
      tpu.enqueue_dma source(%36 : memref<1x64xf32, #tpu.memory_space<any>>) target(%37 : memref<1x64xf32, #tpu.memory_space<vmem>>) target_semaphore(%39 : memref<!tpu.dma_semaphore, #tpu.memory_space<semaphore_mem>>)
      %40 = arith.index_cast %arg0 : i32 to index
      %c4 = arith.constant 4 : index
      %41 = memref.load %arg2[%40, %c4] : memref<1x8xi32, #tpu.memory_space<smem>>
      %c4_i32 = arith.constant 4 : i32
      %c0_i32_25 = arith.constant 0 : i32
      %42 = tpu.memref_slice %arg3[%41, %c0_i32_25] : memref<512x64xf32, #tpu.memory_space<any>> -> memref<1x64xf32, #tpu.memory_space<any>>
      %c4_i32_26 = arith.constant 4 : i32
      %c0_i32_27 = arith.constant 0 : i32
      %43 = tpu.memref_slice %arg14[%c4_i32_26, %c0_i32_27] : memref<8x64xf32, #tpu.memory_space<vmem>> -> memref<1x64xf32, #tpu.memory_space<vmem>>
      %44 = tpu.memref_slice %arg15[%c4_i32] : memref<8x!tpu.dma_semaphore, #tpu.memory_space<semaphore_mem>> -> memref<1x!tpu.dma_semaphore, #tpu.memory_space<semaphore_mem>>
      %45 = tpu.memref_squeeze %44 : memref<1x!tpu.dma_semaphore, #tpu.memory_space<semaphore_mem>> -> memref<!tpu.dma_semaphore, #tpu.memory_space<semaphore_mem>>
      tpu.enqueue_dma source(%42 : memref<1x64xf32, #tpu.memory_space<any>>) target(%43 : memref<1x64xf32, #tpu.memory_space<vmem>>) target_semaphore(%45 : memref<!tpu.dma_semaphore, #tpu.memory_space<semaphore_mem>>)
      %46 = arith.index_cast %arg0 : i32 to index
      %c5 = arith.constant 5 : index
      %47 = memref.load %arg2[%46, %c5] : memref<1x8xi32, #tpu.memory_space<smem>>
      %c5_i32 = arith.constant 5 : i32
      %c0_i32_28 = arith.constant 0 : i32
      %48 = tpu.memref_slice %arg3[%47, %c0_i32_28] : memref<512x64xf32, #tpu.memory_space<any>> -> memref<1x64xf32, #tpu.memory_space<any>>
      %c5_i32_29 = arith.constant 5 : i32
      %c0_i32_30 = arith.constant 0 : i32
      %49 = tpu.memref_slice %arg14[%c5_i32_29, %c0_i32_30] : memref<8x64xf32, #tpu.memory_space<vmem>> -> memref<1x64xf32, #tpu.memory_space<vmem>>
      %50 = tpu.memref_slice %arg15[%c5_i32] : memref<8x!tpu.dma_semaphore, #tpu.memory_space<semaphore_mem>> -> memref<1x!tpu.dma_semaphore, #tpu.memory_space<semaphore_mem>>
      %51 = tpu.memref_squeeze %50 : memref<1x!tpu.dma_semaphore, #tpu.memory_space<semaphore_mem>> -> memref<!tpu.dma_semaphore, #tpu.memory_space<semaphore_mem>>
      tpu.enqueue_dma source(%48 : memref<1x64xf32, #tpu.memory_space<any>>) target(%49 : memref<1x64xf32, #tpu.memory_space<vmem>>) target_semaphore(%51 : memref<!tpu.dma_semaphore, #tpu.memory_space<semaphore_mem>>)
      %52 = arith.index_cast %arg0 : i32 to index
      %c6 = arith.constant 6 : index
      %53 = memref.load %arg2[%52, %c6] : memref<1x8xi32, #tpu.memory_space<smem>>
      %c6_i32 = arith.constant 6 : i32
      %c0_i32_31 = arith.constant 0 : i32
      %54 = tpu.memref_slice %arg3[%53, %c0_i32_31] : memref<512x64xf32, #tpu.memory_space<any>> -> memref<1x64xf32, #tpu.memory_space<any>>
      %c6_i32_32 = arith.constant 6 : i32
      %c0_i32_33 = arith.constant 0 : i32
      %55 = tpu.memref_slice %arg14[%c6_i32_32, %c0_i32_33] : memref<8x64xf32, #tpu.memory_space<vmem>> -> memref<1x64xf32, #tpu.memory_space<vmem>>
      %56 = tpu.memref_slice %arg15[%c6_i32] : memref<8x!tpu.dma_semaphore, #tpu.memory_space<semaphore_mem>> -> memref<1x!tpu.dma_semaphore, #tpu.memory_space<semaphore_mem>>
      %57 = tpu.memref_squeeze %56 : memref<1x!tpu.dma_semaphore, #tpu.memory_space<semaphore_mem>> -> memref<!tpu.dma_semaphore, #tpu.memory_space<semaphore_mem>>
      tpu.enqueue_dma source(%54 : memref<1x64xf32, #tpu.memory_space<any>>) target(%55 : memref<1x64xf32, #tpu.memory_space<vmem>>) target_semaphore(%57 : memref<!tpu.dma_semaphore, #tpu.memory_space<semaphore_mem>>)
      %58 = arith.index_cast %arg0 : i32 to index
      %c7 = arith.constant 7 : index
      %59 = memref.load %arg2[%58, %c7] : memref<1x8xi32, #tpu.memory_space<smem>>
      %c7_i32 = arith.constant 7 : i32
      %c0_i32_34 = arith.constant 0 : i32
      %60 = tpu.memref_slice %arg3[%59, %c0_i32_34] : memref<512x64xf32, #tpu.memory_space<any>> -> memref<1x64xf32, #tpu.memory_space<any>>
      %c7_i32_35 = arith.constant 7 : i32
      %c0_i32_36 = arith.constant 0 : i32
      %61 = tpu.memref_slice %arg14[%c7_i32_35, %c0_i32_36] : memref<8x64xf32, #tpu.memory_space<vmem>> -> memref<1x64xf32, #tpu.memory_space<vmem>>
      %62 = tpu.memref_slice %arg15[%c7_i32] : memref<8x!tpu.dma_semaphore, #tpu.memory_space<semaphore_mem>> -> memref<1x!tpu.dma_semaphore, #tpu.memory_space<semaphore_mem>>
      %63 = tpu.memref_squeeze %62 : memref<1x!tpu.dma_semaphore, #tpu.memory_space<semaphore_mem>> -> memref<!tpu.dma_semaphore, #tpu.memory_space<semaphore_mem>>
      tpu.enqueue_dma source(%60 : memref<1x64xf32, #tpu.memory_space<any>>) target(%61 : memref<1x64xf32, #tpu.memory_space<vmem>>) target_semaphore(%63 : memref<!tpu.dma_semaphore, #tpu.memory_space<semaphore_mem>>)
      %c0_i32_37 = arith.constant 0 : i32
      %c0_i32_38 = arith.constant 0 : i32
      %64 = tpu.memref_slice %arg3[%17, %c0_i32_38] : memref<512x64xf32, #tpu.memory_space<any>> -> memref<1x64xf32, #tpu.memory_space<any>>
      %c0_i32_39 = arith.constant 0 : i32
      %c0_i32_40 = arith.constant 0 : i32
      %65 = tpu.memref_slice %arg14[%c0_i32_39, %c0_i32_40] : memref<8x64xf32, #tpu.memory_space<vmem>> -> memref<1x64xf32, #tpu.memory_space<vmem>>
      %66 = tpu.memref_slice %arg15[%c0_i32_37] : memref<8x!tpu.dma_semaphore, #tpu.memory_space<semaphore_mem>> -> memref<1x!tpu.dma_semaphore, #tpu.memory_space<semaphore_mem>>
      %67 = tpu.memref_squeeze %66 : memref<1x!tpu.dma_semaphore, #tpu.memory_space<semaphore_mem>> -> memref<!tpu.dma_semaphore, #tpu.memory_space<semaphore_mem>>
      tpu.wait_dma2 semaphore(%67 : memref<!tpu.dma_semaphore, #tpu.memory_space<semaphore_mem>>) src(%64 : memref<1x64xf32, #tpu.memory_space<any>>) dst(%65 : memref<1x64xf32, #tpu.memory_space<vmem>>)
      %c1_i32_41 = arith.constant 1 : i32
      %c0_i32_42 = arith.constant 0 : i32
      %68 = tpu.memref_slice %arg3[%23, %c0_i32_42] : memref<512x64xf32, #tpu.memory_space<any>> -> memref<1x64xf32, #tpu.memory_space<any>>
      %c1_i32_43 = arith.constant 1 : i32
      %c0_i32_44 = arith.constant 0 : i32
      %69 = tpu.memref_slice %arg14[%c1_i32_43, %c0_i32_44] : memref<8x64xf32, #tpu.memory_space<vmem>> -> memref<1x64xf32, #tpu.memory_space<vmem>>
      %70 = tpu.memref_slice %arg15[%c1_i32_41] : memref<8x!tpu.dma_semaphore, #tpu.memory_space<semaphore_mem>> -> memref<1x!tpu.dma_semaphore, #tpu.memory_space<semaphore_mem>>
      %71 = tpu.memref_squeeze %70 : memref<1x!tpu.dma_semaphore, #tpu.memory_space<semaphore_mem>> -> memref<!tpu.dma_semaphore, #tpu.memory_space<semaphore_mem>>
      tpu.wait_dma2 semaphore(%71 : memref<!tpu.dma_semaphore, #tpu.memory_space<semaphore_mem>>) src(%68 : memref<1x64xf32, #tpu.memory_space<any>>) dst(%69 : memref<1x64xf32, #tpu.memory_space<vmem>>)
      %c2_i32_45 = arith.constant 2 : i32
      %c0_i32_46 = arith.constant 0 : i32
      %72 = tpu.memref_slice %arg3[%29, %c0_i32_46] : memref<512x64xf32, #tpu.memory_space<any>> -> memref<1x64xf32, #tpu.memory_space<any>>
      %c2_i32_47 = arith.constant 2 : i32
      %c0_i32_48 = arith.constant 0 : i32
      %73 = tpu.memref_slice %arg14[%c2_i32_47, %c0_i32_48] : memref<8x64xf32, #tpu.memory_space<vmem>> -> memref<1x64xf32, #tpu.memory_space<vmem>>
      %74 = tpu.memref_slice %arg15[%c2_i32_45] : memref<8x!tpu.dma_semaphore, #tpu.memory_space<semaphore_mem>> -> memref<1x!tpu.dma_semaphore, #tpu.memory_space<semaphore_mem>>
      %75 = tpu.memref_squeeze %74 : memref<1x!tpu.dma_semaphore, #tpu.memory_space<semaphore_mem>> -> memref<!tpu.dma_semaphore, #tpu.memory_space<semaphore_mem>>
      tpu.wait_dma2 semaphore(%75 : memref<!tpu.dma_semaphore, #tpu.memory_space<semaphore_mem>>) src(%72 : memref<1x64xf32, #tpu.memory_space<any>>) dst(%73 : memref<1x64xf32, #tpu.memory_space<vmem>>)
      %c3_i32_49 = arith.constant 3 : i32
      %c0_i32_50 = arith.constant 0 : i32
      %76 = tpu.memref_slice %arg3[%35, %c0_i32_50] : memref<512x64xf32, #tpu.memory_space<any>> -> memref<1x64xf32, #tpu.memory_space<any>>
      %c3_i32_51 = arith.constant 3 : i32
      %c0_i32_52 = arith.constant 0 : i32
      %77 = tpu.memref_slice %arg14[%c3_i32_51, %c0_i32_52] : memref<8x64xf32, #tpu.memory_space<vmem>> -> memref<1x64xf32, #tpu.memory_space<vmem>>
      %78 = tpu.memref_slice %arg15[%c3_i32_49] : memref<8x!tpu.dma_semaphore, #tpu.memory_space<semaphore_mem>> -> memref<1x!tpu.dma_semaphore, #tpu.memory_space<semaphore_mem>>
      %79 = tpu.memref_squeeze %78 : memref<1x!tpu.dma_semaphore, #tpu.memory_space<semaphore_mem>> -> memref<!tpu.dma_semaphore, #tpu.memory_space<semaphore_mem>>
      tpu.wait_dma2 semaphore(%79 : memref<!tpu.dma_semaphore, #tpu.memory_space<semaphore_mem>>) src(%76 : memref<1x64xf32, #tpu.memory_space<any>>) dst(%77 : memref<1x64xf32, #tpu.memory_space<vmem>>)
      %c4_i32_53 = arith.constant 4 : i32
      %c0_i32_54 = arith.constant 0 : i32
      %80 = tpu.memref_slice %arg3[%41, %c0_i32_54] : memref<512x64xf32, #tpu.memory_space<any>> -> memref<1x64xf32, #tpu.memory_space<any>>
      %c4_i32_55 = arith.constant 4 : i32
      %c0_i32_56 = arith.constant 0 : i32
      %81 = tpu.memref_slice %arg14[%c4_i32_55, %c0_i32_56] : memref<8x64xf32, #tpu.memory_space<vmem>> -> memref<1x64xf32, #tpu.memory_space<vmem>>
      %82 = tpu.memref_slice %arg15[%c4_i32_53] : memref<8x!tpu.dma_semaphore, #tpu.memory_space<semaphore_mem>> -> memref<1x!tpu.dma_semaphore, #tpu.memory_space<semaphore_mem>>
      %83 = tpu.memref_squeeze %82 : memref<1x!tpu.dma_semaphore, #tpu.memory_space<semaphore_mem>> -> memref<!tpu.dma_semaphore, #tpu.memory_space<semaphore_mem>>
      tpu.wait_dma2 semaphore(%83 : memref<!tpu.dma_semaphore, #tpu.memory_space<semaphore_mem>>) src(%80 : memref<1x64xf32, #tpu.memory_space<any>>) dst(%81 : memref<1x64xf32, #tpu.memory_space<vmem>>)
      %c5_i32_57 = arith.constant 5 : i32
      %c0_i32_58 = arith.constant 0 : i32
      %84 = tpu.memref_slice %arg3[%47, %c0_i32_58] : memref<512x64xf32, #tpu.memory_space<any>> -> memref<1x64xf32, #tpu.memory_space<any>>
      %c5_i32_59 = arith.constant 5 : i32
      %c0_i32_60 = arith.constant 0 : i32
      %85 = tpu.memref_slice %arg14[%c5_i32_59, %c0_i32_60] : memref<8x64xf32, #tpu.memory_space<vmem>> -> memref<1x64xf32, #tpu.memory_space<vmem>>
      %86 = tpu.memref_slice %arg15[%c5_i32_57] : memref<8x!tpu.dma_semaphore, #tpu.memory_space<semaphore_mem>> -> memref<1x!tpu.dma_semaphore, #tpu.memory_space<semaphore_mem>>
      %87 = tpu.memref_squeeze %86 : memref<1x!tpu.dma_semaphore, #tpu.memory_space<semaphore_mem>> -> memref<!tpu.dma_semaphore, #tpu.memory_space<semaphore_mem>>
      tpu.wait_dma2 semaphore(%87 : memref<!tpu.dma_semaphore, #tpu.memory_space<semaphore_mem>>) src(%84 : memref<1x64xf32, #tpu.memory_space<any>>) dst(%85 : memref<1x64xf32, #tpu.memory_space<vmem>>)
      %c6_i32_61 = arith.constant 6 : i32
      %c0_i32_62 = arith.constant 0 : i32
      %88 = tpu.memref_slice %arg3[%53, %c0_i32_62] : memref<512x64xf32, #tpu.memory_space<any>> -> memref<1x64xf32, #tpu.memory_space<any>>
      %c6_i32_63 = arith.constant 6 : i32
      %c0_i32_64 = arith.constant 0 : i32
      %89 = tpu.memref_slice %arg14[%c6_i32_63, %c0_i32_64] : memref<8x64xf32, #tpu.memory_space<vmem>> -> memref<1x64xf32, #tpu.memory_space<vmem>>
      %90 = tpu.memref_slice %arg15[%c6_i32_61] : memref<8x!tpu.dma_semaphore, #tpu.memory_space<semaphore_mem>> -> memref<1x!tpu.dma_semaphore, #tpu.memory_space<semaphore_mem>>
      %91 = tpu.memref_squeeze %90 : memref<1x!tpu.dma_semaphore, #tpu.memory_space<semaphore_mem>> -> memref<!tpu.dma_semaphore, #tpu.memory_space<semaphore_mem>>
      tpu.wait_dma2 semaphore(%91 : memref<!tpu.dma_semaphore, #tpu.memory_space<semaphore_mem>>) src(%88 : memref<1x64xf32, #tpu.memory_space<any>>) dst(%89 : memref<1x64xf32, #tpu.memory_space<vmem>>)
      %c7_i32_65 = arith.constant 7 : i32
      %c0_i32_66 = arith.constant 0 : i32
      %92 = tpu.memref_slice %arg3[%59, %c0_i32_66] : memref<512x64xf32, #tpu.memory_space<any>> -> memref<1x64xf32, #tpu.memory_space<any>>
      %c7_i32_67 = arith.constant 7 : i32
      %c0_i32_68 = arith.constant 0 : i32
      %93 = tpu.memref_slice %arg14[%c7_i32_67, %c0_i32_68] : memref<8x64xf32, #tpu.memory_space<vmem>> -> memref<1x64xf32, #tpu.memory_space<vmem>>
      %94 = tpu.memref_slice %arg15[%c7_i32_65] : memref<8x!tpu.dma_semaphore, #tpu.memory_space<semaphore_mem>> -> memref<1x!tpu.dma_semaphore, #tpu.memory_space<semaphore_mem>>
      %95 = tpu.memref_squeeze %94 : memref<1x!tpu.dma_semaphore, #tpu.memory_space<semaphore_mem>> -> memref<!tpu.dma_semaphore, #tpu.memory_space<semaphore_mem>>
      tpu.wait_dma2 semaphore(%95 : memref<!tpu.dma_semaphore, #tpu.memory_space<semaphore_mem>>) src(%92 : memref<1x64xf32, #tpu.memory_space<any>>) dst(%93 : memref<1x64xf32, #tpu.memory_space<vmem>>)
      %c0_69 = arith.constant 0 : index
      %c0_70 = arith.constant 0 : index
      %96 = vector.load %arg14[%c0_69, %c0_70] : memref<8x64xf32, #tpu.memory_space<vmem>>, vector<8x64xf32>
      %97 = arith.truncf %96 : vector<8x64xf32> to vector<8x64xbf16>
      %c0_71 = arith.constant 0 : index
      %c0_72 = arith.constant 0 : index
      %98 = vector.load %arg16[%c0_71, %c0_72] : memref<8x128xf32, #tpu.memory_space<vmem>>, vector<8x128xf32>
      %99 = arith.truncf %98 : vector<8x128xf32> to vector<8x128xbf16>
      %c0_73 = arith.constant 0 : index
      %c0_74 = arith.constant 0 : index
      %100 = vector.load %arg6[%c0_73, %c0_74] : memref<64x512xbf16, #tpu.memory_space<vmem>>, vector<64x512xbf16>
      %cst_75 = arith.constant dense<0.000000e+00> : vector<8x512xf32>
      %101 = tpu.matmul %97, %100, %cst_75 {dimension_numbers = #tpu.dot_dimension_numbers<[1], [0], [0], [1], [0, 0, 1, 1], [], []>} : vector<8x64xbf16>, vector<64x512xbf16>, vector<8x512xf32> -> vector<8x512xf32>
      %c0_76 = arith.constant 0 : index
      %c0_77 = arith.constant 0 : index
      %102 = vector.load %arg7[%c0_76, %c0_77] : memref<128x512xbf16, #tpu.memory_space<vmem>>, vector<128x512xbf16>
      %cst_78 = arith.constant dense<0.000000e+00> : vector<8x512xf32>
      %103 = tpu.matmul %99, %102, %cst_78 {dimension_numbers = #tpu.dot_dimension_numbers<[1], [0], [0], [1], [0, 0, 1, 1], [], []>} : vector<8x128xbf16>, vector<128x512xbf16>, vector<8x512xf32> -> vector<8x512xf32>
      %104 = arith.addf %101, %103 : vector<8x512xf32>
      %c0_79 = arith.constant 0 : index
      %c0_80 = arith.constant 0 : index
      %105 = vector.load %arg8[%c0_79, %c0_80] : memref<1x512xf32, #tpu.memory_space<vmem>>, vector<1x512xf32>
      %106 = vector.broadcast %105 : vector<1x512xf32> to vector<8x512xf32>
      %107 = arith.addf %104, %106 : vector<8x512xf32>
      %108 = vector.extract_strided_slice %107 {offsets = [0, 0], sizes = [8, 128], strides = [1, 1]} : vector<8x512xf32> to vector<8x128xf32>
      %109 = arith.negf %108 : vector<8x128xf32>
      %110 = math.exp %109 : vector<8x128xf32>
      %cst_81 = arith.constant 1.000000e+00 : f32
      %111 = vector.broadcast %cst_81 : f32 to vector<8x128xf32>
      %112 = arith.addf %111, %110 : vector<8x128xf32>
      %113 = arith.divf %111, %112 : vector<8x128xf32>
      %114 = vector.extract_strided_slice %107 {offsets = [0, 128], sizes = [8, 128], strides = [1, 1]} : vector<8x512xf32> to vector<8x128xf32>
      %115 = arith.negf %114 : vector<8x128xf32>
      %116 = math.exp %115 : vector<8x128xf32>
      %cst_82 = arith.constant 1.000000e+00 : f32
      %117 = vector.broadcast %cst_82 : f32 to vector<8x128xf32>
      %118 = arith.addf %117, %116 : vector<8x128xf32>
      %119 = arith.divf %117, %118 : vector<8x128xf32>
      %120 = vector.extract_strided_slice %107 {offsets = [0, 256], sizes = [8, 128], strides = [1, 1]} : vector<8x512xf32> to vector<8x128xf32>
      %121 = math.tanh %120 : vector<8x128xf32>
      %122 = vector.extract_strided_slice %107 {offsets = [0, 384], sizes = [8, 128], strides = [1, 1]} : vector<8x512xf32> to vector<8x128xf32>
      %123 = arith.negf %122 : vector<8x128xf32>
      %124 = math.exp %123 : vector<8x128xf32>
      %cst_83 = arith.constant 1.000000e+00 : f32
      %125 = vector.broadcast %cst_83 : f32 to vector<8x128xf32>
      %126 = arith.addf %125, %124 : vector<8x128xf32>
      %127 = arith.divf %125, %126 : vector<8x128xf32>
      %c0_84 = arith.constant 0 : index
      %c0_85 = arith.constant 0 : index
      %128 = vector.load %arg17[%c0_84, %c0_85] : memref<8x128xf32, #tpu.memory_space<vmem>>, vector<8x128xf32>
      %129 = arith.mulf %119, %128 : vector<8x128xf32>
      %130 = arith.mulf %113, %121 : vector<8x128xf32>
      %131 = arith.addf %129, %130 : vector<8x128xf32>
      %132 = math.tanh %131 : vector<8x128xf32>
      %133 = arith.mulf %127, %132 : vector<8x128xf32>
      %c0_86 = arith.constant 0 : index
      %c0_87 = arith.constant 0 : index
      %134 = vector.load %arg16[%c0_86, %c0_87] : memref<8x128xf32, #tpu.memory_space<vmem>>, vector<8x128xf32>
      tpu.vector_store %arg16[%c0_86, %c0_87], %133 {strides = array<i32>} : memref<8x128xf32, #tpu.memory_space<vmem>>, vector<8x128xf32>,
      %c0_88 = arith.constant 0 : index
      %c0_89 = arith.constant 0 : index
      %135 = vector.load %arg17[%c0_88, %c0_89] : memref<8x128xf32, #tpu.memory_space<vmem>>, vector<8x128xf32>
      tpu.vector_store %arg17[%c0_88, %c0_89], %131 {strides = array<i32>} : memref<8x128xf32, #tpu.memory_space<vmem>>, vector<8x128xf32>,
      %c0_90 = arith.constant 0 : index
      %c0_91 = arith.constant 0 : index
      %136 = vector.load %arg12[%c0_90, %c0_91] : memref<8x128xf32, #tpu.memory_space<vmem>>, vector<8x128xf32>
      tpu.vector_store %arg12[%c0_90, %c0_91], %133 {strides = array<i32>} : memref<8x128xf32, #tpu.memory_space<vmem>>, vector<8x128xf32>,
      %c0_92 = arith.constant 0 : index
      %c0_93 = arith.constant 0 : index
      %137 = vector.load %arg13[%c0_92, %c0_93] : memref<8x128xf32, #tpu.memory_space<vmem>>, vector<8x128xf32>
      tpu.vector_store %arg13[%c0_92, %c0_93], %131 {strides = array<i32>} : memref<8x128xf32, #tpu.memory_space<vmem>>, vector<8x128xf32>,
    } else {
    }
    %c0 = arith.constant 0 : index
    %c0_1 = arith.constant 0 : index
    %3 = vector.load %arg16[%c0, %c0_1] : memref<8x128xf32, #tpu.memory_space<vmem>>, vector<8x128xf32>
    %4 = arith.truncf %3 : vector<8x128xf32> to vector<8x128xbf16>
    %c0_2 = arith.constant 0 : index
    %c0_3 = arith.constant 0 : index
    %5 = vector.load %arg9[%c0_2, %c0_3] : memref<128x128xbf16, #tpu.memory_space<vmem>>, vector<128x128xbf16>
    %cst = arith.constant dense<0.000000e+00> : vector<8x128xf32>
    %6 = tpu.matmul %4, %5, %cst {dimension_numbers = #tpu.dot_dimension_numbers<[1], [0], [0], [1], [0, 0, 1, 1], [], []>} : vector<8x128xbf16>, vector<128x128xbf16>, vector<8x128xf32> -> vector<8x128xf32>
    %c0_4 = arith.constant 0 : index
    %c0_5 = arith.constant 0 : index
    %7 = vector.load %arg10[%c0_4, %c0_5] : memref<1x128xf32, #tpu.memory_space<vmem>>, vector<1x128xf32>
    %8 = vector.broadcast %7 : vector<1x128xf32> to vector<8x128xf32>
    %9 = arith.addf %6, %8 : vector<8x128xf32>
    %c0_6 = arith.constant 0 : index
    %c0_7 = arith.constant 0 : index
    %c0_8 = arith.constant 0 : index
    %10 = vector.load %arg11[%c0_6, %c0_7, %c0_8] : memref<1x8x128xf32, #tpu.memory_space<vmem>>, vector<1x8x128xf32>
    %11 = vector.shape_cast %10 : vector<1x8x128xf32> to vector<8x128xf32>
    %12 = vector.shape_cast %9 : vector<8x128xf32> to vector<1x8x128xf32>
    tpu.vector_store %arg11[%c0_6, %c0_7, %c0_8], %12 {strides = array<i32>} : memref<1x8x128xf32, #tpu.memory_space<vmem>>, vector<1x8x128xf32>,
    return
  }
  func.func @transform_1(%arg0: i32, %arg1: i32, %arg2: memref<1x8xi32, #tpu.memory_space<smem>>) -> (i32, i32) {
    %c0_i32 = arith.constant 0 : i32
    %c0_i32_0 = arith.constant 0 : i32
    %c0_i32_1 = arith.constant 0 : i32
    return %c0_i32, %c0_i32_0 : i32, i32
  }
  func.func @transform_2(%arg0: i32, %arg1: i32, %arg2: memref<1x8xi32, #tpu.memory_space<smem>>) -> (i32, i32) {
    %c0_i32 = arith.constant 0 : i32
    %c0_i32_0 = arith.constant 0 : i32
    %c0_i32_1 = arith.constant 0 : i32
    return %c0_i32, %c0_i32_0 : i32, i32
  }
  func.func @transform_3(%arg0: i32, %arg1: i32, %arg2: memref<1x8xi32, #tpu.memory_space<smem>>) -> (i32, i32) {
    %c0_i32 = arith.constant 0 : i32
    %c0_i32_0 = arith.constant 0 : i32
    %c0_i32_1 = arith.constant 0 : i32
    return %c0_i32, %c0_i32_0 : i32, i32
  }
  func.func @transform_4(%arg0: i32, %arg1: i32, %arg2: memref<1x8xi32, #tpu.memory_space<smem>>) -> (i32, i32) {
    %c0_i32 = arith.constant 0 : i32
    %c0_i32_0 = arith.constant 0 : i32
    %c0_i32_1 = arith.constant 0 : i32
    return %c0_i32, %c0_i32_0 : i32, i32
  }
  func.func @transform_5(%arg0: i32, %arg1: i32, %arg2: memref<1x8xi32, #tpu.memory_space<smem>>) -> (i32, i32) {
    %c0_i32 = arith.constant 0 : i32
    %c0_i32_0 = arith.constant 0 : i32
    %c0_i32_1 = arith.constant 0 : i32
    return %c0_i32, %c0_i32_0 : i32, i32
  }
  func.func @transform_6(%arg0: i32, %arg1: i32, %arg2: memref<1x8xi32, #tpu.memory_space<smem>>) -> (i32, i32) {
    %c0_i32 = arith.constant 0 : i32
    %c0_i32_0 = arith.constant 0 : i32
    return %c0_i32, %arg1 : i32, i32
  }
  func.func @transform_7(%arg0: i32, %arg1: i32, %arg2: memref<1x8xi32, #tpu.memory_space<smem>>) -> (i32, i32) {
    %c0_i32 = arith.constant 0 : i32
    %c0_i32_0 = arith.constant 0 : i32
    return %c0_i32, %arg1 : i32, i32
  }
  func.func @transform_8(%arg0: i32, %arg1: i32, %arg2: memref<1x8xi32, #tpu.memory_space<smem>>) -> (i32, i32, i32) {
    %c0_i32 = arith.constant 0 : i32
    %c0_i32_0 = arith.constant 0 : i32
    return %arg0, %c0_i32, %arg1 : i32, i32, i32
  }
  func.func @transform_9(%arg0: i32, %arg1: i32, %arg2: memref<1x8xi32, #tpu.memory_space<smem>>) -> (i32, i32) {
    %c0_i32 = arith.constant 0 : i32
    %c0_i32_0 = arith.constant 0 : i32
    %c0_i32_1 = arith.constant 0 : i32
    return %c0_i32, %c0_i32_0 : i32, i32
  }
  func.func @transform_10(%arg0: i32, %arg1: i32, %arg2: memref<1x8xi32, #tpu.memory_space<smem>>) -> (i32, i32) {
    %c0_i32 = arith.constant 0 : i32
    %c0_i32_0 = arith.constant 0 : i32
    %c0_i32_1 = arith.constant 0 : i32
    return %c0_i32, %c0_i32_0 : i32, i32
  }
}

</mosaic_0001>

<llo_original>
// kernel: tpu_custom_call.1
$region0: #{tpu_custom_call.1}
  #allocation0 [shape = 'u32[]', space=smem, size = 0x4, offset = 0x4, fixed_abs, tag = 'smem constant byte address 0x4 - core index']
  #allocation1 [shape = 'u32[144,128]{1,0:T(1,128)}', space=vmem, size = 0x12000, scoped, tag = 'internal scratch']
  #allocation2 [shape = 'f32[8,64]{1,0:T(8,128)}', space=vmem, size = 0x1000, scoped, tag = 'scratch operand']
  #allocation3 [shape = 's32[8]{0}', space=sflag, size = 0x20, scoped, tag = 'scratch operand']
  #allocation4 [shape = 'f32[8,128]{1,0:T(8,128)}', space=vmem, size = 0x1000, scoped, tag = 'scratch operand']
  #allocation5 [shape = 'f32[8,128]{1,0:T(8,128)}', space=vmem, size = 0x1000, scoped, tag = 'scratch operand']
  #allocation6 [shape = 's32[1]{0}', space=sflag, size = 0x4, scoped, tag = 'scoped memory for tpu_custom_call.1']
  #allocation7 [shape = 'u8[512]{0}', space=smem, size = 0x200, scoped, tag = 'prefetched SMEM operand 0']
  #allocation14 [shape = 's32[]', space=sflag, size = 0x4, offset = 0, fixed_abs, tag = 'sflag constant byte address 0x0 - dummy sync flag']
  #allocation15 [shape = 's32[]', space=sflag, size = 0x4, offset = 0, fixed_abs, tag = 'sflag constant byte address 0x0 - dummy sync flag']
  #allocation16 [shape = 's32[]', space=sflag, size = 0x4, offset = 0, fixed_abs, tag = 'sflag constant byte address 0x0 - dummy sync flag']
  #allocation17 [shape = 's32[]', space=sflag, size = 0x4, offset = 0, fixed_abs, tag = 'sflag constant byte address 0x0 - dummy sync flag']
  #allocation18 [shape = 's32[]', space=sflag, size = 0x4, offset = 0, fixed_abs, tag = 'sflag constant byte address 0x0 - dummy sync flag']
  #allocation19 [shape = 's32[]', space=sflag, size = 0x4, offset = 0, fixed_abs, tag = 'sflag constant byte address 0x0 - dummy sync flag']
  #allocation20 [shape = 's32[]', space=sflag, size = 0x4, offset = 0, fixed_abs, tag = 'sflag constant byte address 0x0 - dummy sync flag']
  #allocation21 [shape = 's32[]', space=sflag, size = 0x4, offset = 0, fixed_abs, tag = 'sflag constant byte address 0x0 - dummy sync flag']
  %s0 = inlined_call_operand.vmem [shape: s32[1,8], index: 0, kind: input, shape index: {}]
  %s1 = inlined_call_operand.vmem [shape: f32[512,64], index: 1, kind: input, shape index: {}]
  %s2 = inlined_call_operand.vmem [shape: f32[8,128], index: 2, kind: input, shape index: {}]
  %s3 = inlined_call_operand.vmem [shape: f32[8,128], index: 3, kind: input, shape index: {}]
  %s4 = inlined_call_operand.vmem [shape: bf16[64,512], index: 4, kind: input, shape index: {}]
  %s5 = inlined_call_operand.vmem [shape: bf16[128,512], index: 5, kind: input, shape index: {}]
  %s6 = inlined_call_operand.vmem [shape: f32[1,512], index: 6, kind: input, shape index: {}]
  %s7 = inlined_call_operand.vmem [shape: bf16[128,512], index: 7, kind: input, shape index: {}]
  %s8 = inlined_call_operand.vmem [shape: f32[1,512], index: 8, kind: input, shape index: {}]
  %s9 = inlined_call_operand.hbm [shape: f32[1,8,512], index: 9, kind: output, shape index: {0}]
  %s10 = inlined_call_operand.hbm [shape: f32[8,128], index: 10, kind: output, shape index: {1}]
  %s11 = inlined_call_operand.hbm [shape: f32[8,128], index: 11, kind: output, shape index: {2}]
  %12 = xla_tuple %s9, %s10, %s11
  %s13 = sld [smem:[#allocation0]]
  $region366: #{tpu_custom_call.1} parent=0
    _
  %s15 = ssub.s32 1, %s13
  %s16 = scalar_select 0, %s15, %s13
  %s17 = sshll.u32 %s0, 4
  %s18 = int_to_ptr.vmem [resolvable:$true] %s17
  %20 = dma.vmem_to_smem %s18, 16, [#allocation7], [#allocation6]
  %21 = dma.done [#allocation6], 16
  %22 = sfence
  $region1: #{tpu_custom_call.1} parent=0
    #allocation8 [shape = 'u8[65536]{0}', space=vmem, size = 0x10000, scoped, tag = 'input window, operand 7']
    #allocation9 [shape = 'u8[8192]{0}', space=vmem, size = 0x2000, scoped, tag = 'output window, operand 0']
    #allocation10 [shape = 's32[2]{0}', space=sflag, size = 0x8, scoped, tag = 'scoped memory for tpu_custom_call.1']
    #allocation11 [shape = 'u8[4096]{0}', space=vmem, size = 0x1000, scoped, tag = 'output window, operand 1, single buffered']
    #allocation12 [shape = 's32[1]{0}', space=sflag, size = 0x4, scoped, tag = 'scoped memory for tpu_custom_call.1']
    #allocation13 [shape = 'u8[4096]{0}', space=vmem, size = 0x1000, scoped, tag = 'output window, operand 2, single buffered']
    %23 = vsyncpa [#allocation10], 0
    %s24 = scalar_lea.sflag [#allocation10], 1
    %25 = vsyncpa %s24, 0
    %26 = vsyncpa [#allocation12], 0
    loop: start=0, step=1, limit=6
    $region2: #{tpu_custom_call.1} parent=1 // loop_pre_header
      _
    $region3: #{tpu_custom_call.1} parent=1 // loop_header
      %s28 = sphi 0, %s32
      %p29 = scmp.ge.s32.totalorder %s28, 6
      %s35 = sphi 0, %s47
      %s36 = sphi 0, %s43
      %s37 = sphi 0, %s35
      %s38 = sphi 0, %s36
      %s39 = sphi 0, %s37
      %s40 = sphi 0, %s38
      %s48 = sphi 0, %s48
      %s50 = sphi 0, %s48
      %s51 = sphi 0, %s50
      %s65 = sphi 0, %s51
      %s69 = sphi 0, %s69
      %s71 = sphi 0, %s69
      %s72 = sphi 0, %s71
      %s86 = sphi 0, %s72
      %s90 = sphi 0, %s90
      %s92 = sphi 0, %s90
      %s93 = sphi 0, %s92
      %s107 = sphi 0, %s93
      %s111 = sphi 0, %s111
      %s113 = sphi 0, %s111
      %s114 = sphi 0, %s113
      %s128 = sphi 0, %s114
      %s132 = sphi 0, %s132
      %s134 = sphi 0, %s132
      %s135 = sphi 0, %s134
      %s149 = sphi 0, %s135
      %s155 = sphi 0, %s157
      %s158 = sphi 0, %s155
      %s159 = sphi 0, %s158
      %s175 = sphi 0, %s159
      %s181 = sphi 0, %s183
      %s184 = sphi 0, %s181
      %s185 = sphi 0, %s184
      %s201 = sphi 0, %s185
      %s209 = sphi 0, %s211
      %s212 = sphi 0, %s209
      %s213 = sphi 0, %s212
      %s229 = sphi 0, %s213
      %s233 = sphi 0, %s233
      %s235 = sphi 0, %s233
      %s236 = sphi 0, %s235
      %s250 = sphi 0, %s236
      %s254 = sphi 0, %s254
      %s256 = sphi 0, %s254
      %s257 = sphi 0, %s256
      %s271 = sphi 0, %s257
    $region4: #{tpu_custom_call.1} parent=1 // loop_header_branch
      %31 = sbr.rel (%p29) target = $region8
    $region5: #{tpu_custom_call.1} parent=1 // loop_body
      %s33 = ssub.s32 %s28, 1
      %s34 = ssub.s32 %s28, 2
      %s41 = sadd.s32 1, %s36
      %p42 = scmp.ge.s32.totalorder %s41, 4
      %s43 = scalar_select %p42, 0, %s41
      %s44 = sadd.s32 1, %s35
      %s45 = scalar_select %p42, %s44, %s35
      %p46 = scmp.ge.s32.totalorder %s45, 1
      %s47 = scalar_select %p46, 0, %s45
      %s49 = sadd.s32 %s48, 1
      %p52 = scmp.eq.s32.totalorder %s28, 3
      %p53 = scmp.ne.s32.totalorder %s48, %s50
      %p54 = scmp.eq.s32.totalorder %s28, 0
      %p55 = por %p53, %p54
      %p56 = scmp.ne.s32.totalorder %s48, %s50
      %p57 = scmp.eq.s32.totalorder %s33, 3
      %p58 = por %p56, %p57
      %p59 = scmp.ne.s32.totalorder %s50, %s51
      %p60 = scmp.eq.s32.totalorder %s33, 0
      %p61 = por %p59, %p60
      %p62 = scmp.ne.s32.totalorder %s50, %s51
      %p63 = scmp.eq.s32.totalorder %s34, 3
      %p64 = por %p62, %p63
      %p66 = scmp.ne.s32.totalorder %s51, %s65
      %p67 = scmp.eq.s32.totalorder %s34, 0
      %p68 = por %p66, %p67
      %s70 = sadd.s32 %s69, 1
      %p73 = scmp.eq.s32.totalorder %s28, 3
      %p74 = scmp.ne.s32.totalorder %s69, %s71
      %p75 = scmp.eq.s32.totalorder %s28, 0
      %p76 = por %p74, %p75
      %p77 = scmp.ne.s32.totalorder %s69, %s71
      %p78 = scmp.eq.s32.totalorder %s33, 3
      %p79 = por %p77, %p78
      %p80 = scmp.ne.s32.totalorder %s71, %s72
      %p81 = scmp.eq.s32.totalorder %s33, 0
      %p82 = por %p80, %p81
      %p83 = scmp.ne.s32.totalorder %s71, %s72
      %p84 = scmp.eq.s32.totalorder %s34, 3
      %p85 = por %p83, %p84
      %p87 = scmp.ne.s32.totalorder %s72, %s86
      %p88 = scmp.eq.s32.totalorder %s34, 0
      %p89 = por %p87, %p88
      %s91 = sadd.s32 %s90, 1
      %p94 = scmp.eq.s32.totalorder %s28, 3
      %p95 = scmp.ne.s32.totalorder %s90, %s92
      %p96 = scmp.eq.s32.totalorder %s28, 0
      %p97 = por %p95, %p96
      %p98 = scmp.ne.s32.totalorder %s90, %s92
      %p99 = scmp.eq.s32.totalorder %s33, 3
      %p100 = por %p98, %p99
      %p101 = scmp.ne.s32.totalorder %s92, %s93
      %p102 = scmp.eq.s32.totalorder %s33, 0
      %p103 = por %p101, %p102
      %p104 = scmp.ne.s32.totalorder %s92, %s93
      %p105 = scmp.eq.s32.totalorder %s34, 3
      %p106 = por %p104, %p105
      %p108 = scmp.ne.s32.totalorder %s93, %s107
      %p109 = scmp.eq.s32.totalorder %s34, 0
      %p110 = por %p108, %p109
      %s112 = sadd.s32 %s111, 1
      %p115 = scmp.eq.s32.totalorder %s28, 3
      %p116 = scmp.ne.s32.totalorder %s111, %s113
      %p117 = scmp.eq.s32.totalorder %s28, 0
      %p118 = por %p116, %p117
      %p119 = scmp.ne.s32.totalorder %s111, %s113
      %p120 = scmp.eq.s32.totalorder %s33, 3
      %p121 = por %p119, %p120
      %p122 = scmp.ne.s32.totalorder %s113, %s114
      %p123 = scmp.eq.s32.totalorder %s33, 0
      %p124 = por %p122, %p123
      %p125 = scmp.ne.s32.totalorder %s113, %s114
      %p126 = scmp.eq.s32.totalorder %s34, 3
      %p127 = por %p125, %p126
      %p129 = scmp.ne.s32.totalorder %s114, %s128
      %p130 = scmp.eq.s32.totalorder %s34, 0
      %p131 = por %p129, %p130
      %s133 = sadd.s32 %s132, 1
      %p136 = scmp.eq.s32.totalorder %s28, 3
      %p137 = scmp.ne.s32.totalorder %s132, %s134
      %p138 = scmp.eq.s32.totalorder %s28, 0
      %p139 = por %p137, %p138
      %p140 = scmp.ne.s32.totalorder %s132, %s134
      %p141 = scmp.eq.s32.totalorder %s33, 3
      %p142 = por %p140, %p141
      %p143 = scmp.ne.s32.totalorder %s134, %s135
      %p144 = scmp.eq.s32.totalorder %s33, 0
      %p145 = por %p143, %p144
      %p146 = scmp.ne.s32.totalorder %s134, %s135
      %p147 = scmp.eq.s32.totalorder %s34, 3
      %p148 = por %p146, %p147
      %p150 = scmp.ne.s32.totalorder %s135, %s149
      %p151 = scmp.eq.s32.totalorder %s34, 0
      %p152 = por %p150, %p151
      %s153 = ssub.s32 %s36, %s43
      %p154 = scmp.eq.s32.totalorder %s153, 0
      %s156 = sadd.s32 %s155, 1
      %s157 = scalar_select %p154, %s155, %s156
      %p160 = pneg %p154
      %p161 = scmp.eq.s32.totalorder %s28, 3
      %p162 = por %p160, %p161
      %p163 = scmp.ne.s32.totalorder %s155, %s158
      %p164 = scmp.eq.s32.totalorder %s28, 0
      %p165 = por %p163, %p164
      %p166 = scmp.ne.s32.totalorder %s155, %s158
      %p167 = scmp.eq.s32.totalorder %s33, 3
      %p168 = por %p166, %p167
      %p169 = scmp.ne.s32.totalorder %s158, %s159
      %p170 = scmp.eq.s32.totalorder %s33, 0
      %p171 = por %p169, %p170
      %p172 = scmp.ne.s32.totalorder %s158, %s159
      %p173 = scmp.eq.s32.totalorder %s34, 3
      %p174 = por %p172, %p173
      %p176 = scmp.ne.s32.totalorder %s159, %s175
      %p177 = scmp.eq.s32.totalorder %s34, 0
      %p178 = por %p176, %p177
      %s179 = ssub.s32 %s36, %s43
      %p180 = scmp.eq.s32.totalorder %s179, 0
      %s182 = sadd.s32 %s181, 1
      %s183 = scalar_select %p180, %s181, %s182
      %p186 = pneg %p180
      %p187 = scmp.eq.s32.totalorder %s28, 3
      %p188 = por %p186, %p187
      %p189 = scmp.ne.s32.totalorder %s181, %s184
      %p190 = scmp.eq.s32.totalorder %s28, 0
      %p191 = por %p189, %p190
      %p192 = scmp.ne.s32.totalorder %s181, %s184
      %p193 = scmp.eq.s32.totalorder %s33, 3
      %p194 = por %p192, %p193
      %p195 = scmp.ne.s32.totalorder %s184, %s185
      %p196 = scmp.eq.s32.totalorder %s33, 0
      %p197 = por %p195, %p196
      %p198 = scmp.ne.s32.totalorder %s184, %s185
      %p199 = scmp.eq.s32.totalorder %s34, 3
      %p200 = por %p198, %p199
      %p202 = scmp.ne.s32.totalorder %s185, %s201
      %p203 = scmp.eq.s32.totalorder %s34, 0
      %p204 = por %p202, %p203
      %s205 = ssub.s32 %s35, %s47
      %s206 = ssub.s32 %s36, %s43
      %s207 = sor.u32 %s205, %s206
      %p208 = scmp.eq.s32.totalorder %s207, 0
      %s210 = sadd.s32 %s209, 1
      %s211 = scalar_select %p208, %s209, %s210
      %p214 = pneg %p208
      %p215 = scmp.eq.s32.totalorder %s28, 3
      %p216 = por %p214, %p215
      %p217 = scmp.ne.s32.totalorder %s209, %s212
      %p218 = scmp.eq.s32.totalorder %s28, 0
      %p219 = por %p217, %p218
      %p220 = scmp.ne.s32.totalorder %s209, %s212
      %p221 = scmp.eq.s32.totalorder %s33, 3
      %p222 = por %p220, %p221
      %p223 = scmp.ne.s32.totalorder %s212, %s213
      %p224 = scmp.eq.s32.totalorder %s33, 0
      %p225 = por %p223, %p224
      %p226 = scmp.ne.s32.totalorder %s212, %s213
      %p227 = scmp.eq.s32.totalorder %s34, 3
      %p228 = por %p226, %p227
      %p230 = scmp.ne.s32.totalorder %s213, %s229
      %p231 = scmp.eq.s32.totalorder %s34, 0
      %p232 = por %p230, %p231
      %s234 = sadd.s32 %s233, 1
      %p237 = scmp.eq.s32.totalorder %s28, 3
      %p238 = scmp.ne.s32.totalorder %s233, %s235
      %p239 = scmp.eq.s32.totalorder %s28, 0
      %p240 = por %p238, %p239
      %p241 = scmp.ne.s32.totalorder %s233, %s235
      %p242 = scmp.eq.s32.totalorder %s33, 3
      %p243 = por %p241, %p242
      %p244 = scmp.ne.s32.totalorder %s235, %s236
      %p245 = scmp.eq.s32.totalorder %s33, 0
      %p246 = por %p244, %p245
      %p247 = scmp.ne.s32.totalorder %s235, %s236
      %p248 = scmp.eq.s32.totalorder %s34, 3
      %p249 = por %p247, %p248
      %p251 = scmp.ne.s32.totalorder %s236, %s250
      %p252 = scmp.eq.s32.totalorder %s34, 0
      %p253 = por %p251, %p252
      %s255 = sadd.s32 %s254, 1
      %p258 = scmp.eq.s32.totalorder %s28, 3
      %p259 = scmp.ne.s32.totalorder %s254, %s256
      %p260 = scmp.eq.s32.totalorder %s28, 0
      %p261 = por %p259, %p260
      %p262 = scmp.ne.s32.totalorder %s254, %s256
      %p263 = scmp.eq.s32.totalorder %s33, 3
      %p264 = por %p262, %p263
      %p265 = scmp.ne.s32.totalorder %s256, %s257
      %p266 = scmp.eq.s32.totalorder %s33, 0
      %p267 = por %p265, %p266
      %p268 = scmp.ne.s32.totalorder %s256, %s257
      %p269 = scmp.eq.s32.totalorder %s34, 3
      %p270 = por %p268, %p269
      %p272 = scmp.ne.s32.totalorder %s257, %s271
      %p273 = scmp.eq.s32.totalorder %s34, 0
      %p274 = por %p272, %p273
      %p275 = scmp.le.s32.totalorder 1, %s28
      %p276 = scmp.lt.s32.totalorder %s28, 5
      %p277 = pnand %p275, %p276
      %p278 = pneg %p277
      // Predicated region
      $region9: #{tpu_custom_call.1} parent=5 // pred_check
        _
      $region10: #{tpu_custom_call.1} parent=5 // pred_check_branch
        %280 = sbr.rel (%p277) target = $region12
      $region11: #{tpu_custom_call.1} parent=5 // pred_region
        %s281 = ssub.s32 %s28, 1
        // Predicated region
        $region13: #{tpu_custom_call.1} parent=11 // pred_check
          %p282 = pneg %p61
        $region14: #{tpu_custom_call.1} parent=11 // pred_check_branch
          %284 = sbr.rel (%p282) target = $region16
        $region15: #{tpu_custom_call.1} parent=11 // pred_region
          _
        $region16: #{tpu_custom_call.1} parent=11 // pred_fallthru
          _
        // Predicated region
        $region17: #{tpu_custom_call.1} parent=11 // pred_check
          %p285 = pneg %p82
        $region18: #{tpu_custom_call.1} parent=11 // pred_check_branch
          %287 = sbr.rel (%p285) target = $region20
        $region19: #{tpu_custom_call.1} parent=11 // pred_region
          _
        $region20: #{tpu_custom_call.1} parent=11 // pred_fallthru
          _
        // Predicated region
        $region21: #{tpu_custom_call.1} parent=11 // pred_check
          %p288 = pneg %p103
        $region22: #{tpu_custom_call.1} parent=11 // pred_check_branch
          %290 = sbr.rel (%p288) target = $region24
        $region23: #{tpu_custom_call.1} parent=11 // pred_region
          _
        $region24: #{tpu_custom_call.1} parent=11 // pred_fallthru
          _
        // Predicated region
        $region25: #{tpu_custom_call.1} parent=11 // pred_check
          %p291 = pneg %p124
        $region26: #{tpu_custom_call.1} parent=11 // pred_check_branch
          %293 = sbr.rel (%p291) target = $region28
        $region27: #{tpu_custom_call.1} parent=11 // pred_region
          _
        $region28: #{tpu_custom_call.1} parent=11 // pred_fallthru
          _
        // Predicated region
        $region29: #{tpu_custom_call.1} parent=11 // pred_check
          %p294 = pneg %p145
        $region30: #{tpu_custom_call.1} parent=11 // pred_check_branch
          %296 = sbr.rel (%p294) target = $region32
        $region31: #{tpu_custom_call.1} parent=11 // pred_region
          _
        $region32: #{tpu_custom_call.1} parent=11 // pred_fallthru
          _
      $region12: #{tpu_custom_call.1} parent=5 // pred_fallthru
        _
      %p297 = scmp.lt.s32.totalorder %s28, 4
      // Predicated region
      $region33: #{tpu_custom_call.1} parent=5 // pred_check
        %p298 = pneg %p297
      $region34: #{tpu_custom_call.1} parent=5 // pred_check_branch
        %300 = sbr.rel (%p298) target = $region36
      $region35: #{tpu_custom_call.1} parent=5 // pred_region
        // Predicated region
        $region37: #{tpu_custom_call.1} parent=35 // pred_check
          %p301 = pneg %p165
        $region38: #{tpu_custom_call.1} parent=35 // pred_check_branch
          %303 = sbr.rel (%p301) target = $region40
        $region39: #{tpu_custom_call.1} parent=35 // pred_region
          %s304 = sand.u32 %s155, 1
          %s305 = sand.u32 %s155, 1
          %s306 = smul.addr %s305, 64
          %s307 = scalar_lea.vmem [#allocation8], %s306
          %s308 = smul.addr %s36, 4
          %s309 = scalar_lea.vmem %s7, %s308
          // Predicated region
          $region41: #{tpu_custom_call.1} parent=39 // pred_check
            _
          $region42: #{tpu_custom_call.1} parent=39 // pred_check_branch
            %311 = sbr.rel (0) target = $region44
          $region43: #{tpu_custom_call.1} parent=39 // pred_region
            // Predicated region
            $region45: #{tpu_custom_call.1} parent=43 // pred_check
              _
            $region46: #{tpu_custom_call.1} parent=43 // pred_check_branch
              %313 = sbr.rel target = $region48
            $region47: #{tpu_custom_call.1} parent=43 // pred_region
              // Predicated region
              $region60: #{tpu_custom_call.1} parent=47 // pred_check
                _
              $region61: #{tpu_custom_call.1} parent=47 // pred_check_branch
                %358 = sbr.rel (0) target = $region63
              $region62: #{tpu_custom_call.1} parent=47 // pred_region
                loop: start=0, step=1, limit=1
                $region64: #{tpu_custom_call.1} parent=62 // loop_pre_header
                  _
                $region65: #{tpu_custom_call.1} parent=62 // loop_header
                  %s360 = sphi 0, %s364
                  %p361 = scmp.ge.s32.totalorder %s360, 1
                  %s365 = sphi %s309, %s309
                  %s366 = sphi %s307, %s307
                $region66: #{tpu_custom_call.1} parent=62 // loop_header_branch
                  %363 = sbr.rel (%p361) target = $region70
                $region67: #{tpu_custom_call.1} parent=62 // loop_body
                  _
                $region68: #{tpu_custom_call.1} parent=62 // loop_footer
                  %s364 = sadd.s32 1, %s360
                $region69: #{tpu_custom_call.1} parent=62 // loop_footer_branch
                  %359 = sbr.rel target = $region65
                $region70: #{tpu_custom_call.1} parent=62 // loop_exit
                  _
                loop: start=0, step=1, limit=1
                $region71: #{tpu_custom_call.1} parent=62 // loop_pre_header
                  _
                $region72: #{tpu_custom_call.1} parent=62 // loop_header
                  %s369 = sphi 0, %s373
                  %p370 = scmp.ge.s32.totalorder %s369, 1
                  %s374 = sphi %s309, %s309
                  %s375 = sphi %s307, %s307
                $region73: #{tpu_custom_call.1} parent=62 // loop_header_branch
                  %372 = sbr.rel (%p370) target = $region77
                $region74: #{tpu_custom_call.1} parent=62 // loop_body
                  %v376 = vld [vmem:[%s374] sm:$0xf]
                  %377 = vst [vmem:[%s375] sm:$0xf] %v376
                  %v378 = vld [vmem:[%s374 + $0x10] sm:$0xf]
                  %379 = vst [vmem:[%s375 + $0x4] sm:$0xf] %v378
                  %v380 = vld [vmem:[%s374 + $0x20] sm:$0xf]
                  %381 = vst [vmem:[%s375 + $0x8] sm:$0xf] %v380
                  %v382 = vld [vmem:[%s374 + $0x30] sm:$0xf]
                  %383 = vst [vmem:[%s375 + $0xc] sm:$0xf] %v382
                  %v384 = vld [vmem:[%s374 + $0x40] sm:$0xf]
                  %385 = vst [vmem:[%s375 + $0x10] sm:$0xf] %v384
                  %v386 = vld [vmem:[%s374 + $0x50] sm:$0xf]
                  %387 = vst [vmem:[%s375 + $0x14] sm:$0xf] %v386
                  %v388 = vld [vmem:[%s374 + $0x60] sm:$0xf]
                  %389 = vst [vmem:[%s375 + $0x18] sm:$0xf] %v388
                  %v390 = vld [vmem:[%s374 + $0x70] sm:$0xf]
                  %391 = vst [vmem:[%s375 + $0x1c] sm:$0xf] %v390
                  %v392 = vld [vmem:[%s374 + $0x80] sm:$0xf]
                  %393 = vst [vmem:[%s375 + $0x20] sm:$0xf] %v392
                  %v394 = vld [vmem:[%s374 + $0x90] sm:$0xf]
                  %395 = vst [vmem:[%s375 + $0x24] sm:$0xf] %v394
                  %v396 = vld [vmem:[%s374 + $0xa0] sm:$0xf]
                  %397 = vst [vmem:[%s375 + $0x28] sm:$0xf] %v396
                  %v398 = vld [vmem:[%s374 + $0xb0] sm:$0xf]
                  %399 = vst [vmem:[%s375 + $0x2c] sm:$0xf] %v398
                  %v400 = vld [vmem:[%s374 + $0xc0] sm:$0xf]
                  %401 = vst [vmem:[%s375 + $0x30] sm:$0xf] %v400
                  %v402 = vld [vmem:[%s374 + $0xd0] sm:$0xf]
                  %403 = vst [vmem:[%s375 + $0x34] sm:$0xf] %v402
                  %v404 = vld [vmem:[%s374 + $0xe0] sm:$0xf]
                  %405 = vst [vmem:[%s375 + $0x38] sm:$0xf] %v404
                  %v406 = vld [vmem:[%s374 + $0xf0] sm:$0xf]
                  %407 = vst [vmem:[%s375 + $0x3c] sm:$0xf] %v406
                $region75: #{tpu_custom_call.1} parent=62 // loop_footer
                  %s373 = sadd.s32 1, %s369
                $region76: #{tpu_custom_call.1} parent=62 // loop_footer_branch
                  %368 = sbr.rel target = $region72
                $region77: #{tpu_custom_call.1} parent=62 // loop_exit
                  _
              $region63: #{tpu_custom_call.1} parent=47 // pred_fallthru
                _
            $region48: #{tpu_custom_call.1} parent=43 // pred_fallthru
              _
            // Predicated region
            $region49: #{tpu_custom_call.1} parent=43 // pred_check
              _
            $region50: #{tpu_custom_call.1} parent=43 // pred_check_branch
              %315 = sbr.rel (0) target = $region52
            $region51: #{tpu_custom_call.1} parent=43 // pred_region
              loop: start=0, step=1, limit=1
              $region53: #{tpu_custom_call.1} parent=51 // loop_pre_header
                _
              $region54: #{tpu_custom_call.1} parent=51 // loop_header
                %s318 = sphi 0, %s322
                %p319 = scmp.ge.s32.totalorder %s318, 1
                %s323 = sphi %s309, %s309
                %s324 = sphi %s307, %s307
              $region55: #{tpu_custom_call.1} parent=51 // loop_header_branch
                %321 = sbr.rel (%p319) target = $region59
              $region56: #{tpu_custom_call.1} parent=51 // loop_body
                %v325 = vld [vmem:[%s323] sm:$0xf]
                %326 = vst [vmem:[%s324] sm:$0xf] %v325
                %v327 = vld [vmem:[%s323 + $0x10] sm:$0xf]
                %328 = vst [vmem:[%s324 + $0x4] sm:$0xf] %v327
                %v329 = vld [vmem:[%s323 + $0x20] sm:$0xf]
                %330 = vst [vmem:[%s324 + $0x8] sm:$0xf] %v329
                %v331 = vld [vmem:[%s323 + $0x30] sm:$0xf]
                %332 = vst [vmem:[%s324 + $0xc] sm:$0xf] %v331
                %v333 = vld [vmem:[%s323 + $0x40] sm:$0xf]
                %334 = vst [vmem:[%s324 + $0x10] sm:$0xf] %v333
                %v335 = vld [vmem:[%s323 + $0x50] sm:$0xf]
                %336 = vst [vmem:[%s324 + $0x14] sm:$0xf] %v335
                %v337 = vld [vmem:[%s323 + $0x60] sm:$0xf]
                %338 = vst [vmem:[%s324 + $0x18] sm:$0xf] %v337
                %v339 = vld [vmem:[%s323 + $0x70] sm:$0xf]
                %340 = vst [vmem:[%s324 + $0x1c] sm:$0xf] %v339
                %v341 = vld [vmem:[%s323 + $0x80] sm:$0xf]
                %342 = vst [vmem:[%s324 + $0x20] sm:$0xf] %v341
                %v343 = vld [vmem:[%s323 + $0x90] sm:$0xf]
                %344 = vst [vmem:[%s324 + $0x24] sm:$0xf] %v343
                %v345 = vld [vmem:[%s323 + $0xa0] sm:$0xf]
                %346 = vst [vmem:[%s324 + $0x28] sm:$0xf] %v345
                %v347 = vld [vmem:[%s323 + $0xb0] sm:$0xf]
                %348 = vst [vmem:[%s324 + $0x2c] sm:$0xf] %v347
                %v349 = vld [vmem:[%s323 + $0xc0] sm:$0xf]
                %350 = vst [vmem:[%s324 + $0x30] sm:$0xf] %v349
                %v351 = vld [vmem:[%s323 + $0xd0] sm:$0xf]
                %352 = vst [vmem:[%s324 + $0x34] sm:$0xf] %v351
                %v353 = vld [vmem:[%s323 + $0xe0] sm:$0xf]
                %354 = vst [vmem:[%s324 + $0x38] sm:$0xf] %v353
                %v355 = vld [vmem:[%s323 + $0xf0] sm:$0xf]
                %356 = vst [vmem:[%s324 + $0x3c] sm:$0xf] %v355
              $region57: #{tpu_custom_call.1} parent=51 // loop_footer
                %s322 = sadd.s32 1, %s318
              $region58: #{tpu_custom_call.1} parent=51 // loop_footer_branch
                %317 = sbr.rel target = $region54
              $region59: #{tpu_custom_call.1} parent=51 // loop_exit
                _
            $region52: #{tpu_custom_call.1} parent=43 // pred_fallthru
              _
          $region44: #{tpu_custom_call.1} parent=39 // pred_fallthru
            _
          %408 = vnop
        $region40: #{tpu_custom_call.1} parent=35 // pred_fallthru
          _
        // Predicated region
        $region78: #{tpu_custom_call.1} parent=35 // pred_check
          %p409 = pneg %p191
        $region79: #{tpu_custom_call.1} parent=35 // pred_check_branch
          %411 = sbr.rel (%p409) target = $region81
        $region80: #{tpu_custom_call.1} parent=35 // pred_region
          %p412 = scmp.lt.s32.totalorder %s36, 3
          %s413 = scalar_select %p412, %s36, 3
          %s414 = scalar_lea.vmem %s8, %s413
        $region81: #{tpu_custom_call.1} parent=35 // pred_fallthru
          _
      $region36: #{tpu_custom_call.1} parent=5 // pred_fallthru
        _
      %p415 = scmp.le.s32.totalorder 1, %s28
      %p416 = scmp.lt.s32.totalorder %s28, 5
      %p417 = pnand %p415, %p416
      %p418 = pneg %p417
      // Predicated region
      $region82: #{tpu_custom_call.1} parent=5 // pred_check
        _
      $region83: #{tpu_custom_call.1} parent=5 // pred_check_branch
        %420 = sbr.rel (%p417) target = $region85
      $region84: #{tpu_custom_call.1} parent=5 // pred_region
        %s421 = ssub.s32 %s28, 1
        %s422 = sand.u32 %s158, 1
        %s423 = sand.u32 %s158, 1
        %s424 = smul.addr %s423, 64
        %s425 = scalar_lea.vmem [#allocation8], %s424
        // Predicated region
        $region86: #{tpu_custom_call.1} parent=84 // pred_check
          %p426 = pneg %p171
        $region87: #{tpu_custom_call.1} parent=84 // pred_check_branch
          %428 = sbr.rel (%p426) target = $region89
        $region88: #{tpu_custom_call.1} parent=84 // pred_region
          _
        $region89: #{tpu_custom_call.1} parent=84 // pred_fallthru
          _
        %p429 = pneg %p61
        %p430 = pneg %p58
        %p431 = pneg %p82
        %p432 = pneg %p79
        %p433 = pneg %p103
        %p434 = pneg %p100
        %p435 = pneg %p124
        %p436 = pneg %p121
        %p437 = pneg %p145
        %p438 = pneg %p142
        %s439 = sand.u32 %s158, 1
        %s440 = sand.u32 %s158, 1
        %s441 = smul.addr %s440, 64
        %s442 = scalar_lea.vmem [#allocation8], %s441
        %p443 = pneg %p171
        %p444 = pneg %p168
        %p445 = scmp.lt.s32.totalorder %s38, 3
        %s446 = scalar_select %p445, %s38, 3
        %s447 = scalar_lea.vmem %s8, %s446
        %p448 = pneg %p197
        %p449 = pneg %p194
        %p450 = pneg %p225
        %p451 = pneg %p222
        %s452 = sand.u32 %s212, 1
        %s453 = scalar_lea.sflag [#allocation10], %s452
        %s454 = sand.u32 %s212, 1
        %s455 = smul.addr %s454, 8
        %s456 = scalar_lea.vmem [#allocation9], %s455
        %p457 = pneg %p246
        %p458 = pneg %p243
        %p459 = pneg %p267
        %p460 = pneg %p264
        %p461 = scmp.lt.s32.totalorder %s38, 3
        %s462 = scalar_select %p461, %s38, 3
        %s463 = scalar_lea.vmem %s8, %s462
        %p465 = scmp.eq.s32.totalorder %s38, 0
        // Predicated region
        $region90: #{tpu_custom_call.1} parent=84 // pred_check
          %p466 = pneg %p465
        $region91: #{tpu_custom_call.1} parent=84 // pred_check_branch
          %468 = sbr.rel (%p466) target = $region93
        $region92: #{tpu_custom_call.1} parent=84 // pred_region
          %p469 = scmp.eq.s32.totalorder %s37, 0
          // Predicated region
          $region94: #{tpu_custom_call.1} parent=92 // pred_check
            %p470 = pneg %p469
          $region95: #{tpu_custom_call.1} parent=92 // pred_check_branch
            %472 = sbr.rel (%p470) target = $region97
          $region96: #{tpu_custom_call.1} parent=92 // pred_region
            %v473 = vld [vmem:[%s2] sm:$0xff]
            %474 = vst [vmem:[#allocation4] sm:$0xff] %v473
            %v475 = vld [vmem:[%s3] sm:$0xff]
            %476 = vst [vmem:[#allocation5] sm:$0xff] %v475
          $region97: #{tpu_custom_call.1} parent=92 // pred_fallthru
            _
          %s477 = smul.u32 %s37, 128
          %s478 = sld [smem:[#allocation7 + %s477]]
          %s479 = scalar_lea.vmem %s1, %s478
          %p481 = scmp.lt.u32.totalorder 1, 8
          %p482 = pneg %p481
          // Predicated region
          $region98: #{tpu_custom_call.1} parent=92 // pred_check
            _
          $region99: #{tpu_custom_call.1} parent=92 // pred_check_branch
            %484 = sbr.rel (%p481) target = $region101
          $region100: #{tpu_custom_call.1} parent=92 // pred_region
            %s499 = sand.u32 1, 7
            %p500 = scmp.eq.s32.totalorder %s499, 0
            %p501 = pneg %p500
            // Predicated region
            $region113: #{tpu_custom_call.1} parent=100 // pred_check
              _
            $region114: #{tpu_custom_call.1} parent=100 // pred_check_branch
              %503 = sbr.rel (%p500) target = $region116
            $region115: #{tpu_custom_call.1} parent=100 // pred_region
              %s504 = sand.u32 1, 7
              %s505 = ssub.s32 1, %s504
              %s506 = scalar_lea.vmem %s479, %s505
              %s507 = ssub.s32 1, %s504
              %s508 = scalar_lea.vmem [#allocation2], %s507
              %s509 = sshllo.u32 0, %s504
              loop: start=0, step=1, limit=1
              $region117: #{tpu_custom_call.1} parent=115 // loop_pre_header
                _
              $region118: #{tpu_custom_call.1} parent=115 // loop_header
                %s511 = sphi 0, %s515
                %p512 = scmp.ge.s32.totalorder %s511, 1
                %s516 = sphi %s506, %s506
                %s517 = sphi %s508, %s508
              $region119: #{tpu_custom_call.1} parent=115 // loop_header_branch
                %514 = sbr.rel (%p512) target = $region123
              $region120: #{tpu_custom_call.1} parent=115 // loop_body
                %v518 = vld [vmem:[%s516] sm:%s509]
                %519 = vst [vmem:[%s517] sm:%s509] %v518
              $region121: #{tpu_custom_call.1} parent=115 // loop_footer
                %s515 = sadd.s32 1, %s511
              $region122: #{tpu_custom_call.1} parent=115 // loop_footer_branch
                %510 = sbr.rel target = $region118
              $region123: #{tpu_custom_call.1} parent=115 // loop_exit
                _
            $region116: #{tpu_custom_call.1} parent=100 // pred_fallthru
              _
          $region101: #{tpu_custom_call.1} parent=92 // pred_fallthru
            _
          // Predicated region
          $region102: #{tpu_custom_call.1} parent=92 // pred_check
            %p485 = pneg %p481
          $region103: #{tpu_custom_call.1} parent=92 // pred_check_branch
            %487 = sbr.rel (%p485) target = $region105
          $region104: #{tpu_custom_call.1} parent=92 // pred_region
            %s488 = sshllo.u32 0, 1
            loop: start=0, step=1, limit=1
            $region106: #{tpu_custom_call.1} parent=104 // loop_pre_header
              _
            $region107: #{tpu_custom_call.1} parent=104 // loop_header
              %s490 = sphi 0, %s494
              %p491 = scmp.ge.s32.totalorder %s490, 1
              %s495 = sphi %s479, %s479
              %s496 = sphi [#allocation2], [#allocation2]
            $region108: #{tpu_custom_call.1} parent=104 // loop_header_branch
              %493 = sbr.rel (%p491) target = $region112
            $region109: #{tpu_custom_call.1} parent=104 // loop_body
              %v497 = vld [vmem:[%s495] sm:%s488]
              %498 = vst [vmem:[%s496] sm:%s488] %v497
            $region110: #{tpu_custom_call.1} parent=104 // loop_footer
              %s494 = sadd.s32 1, %s490
            $region111: #{tpu_custom_call.1} parent=104 // loop_footer_branch
              %489 = sbr.rel target = $region107
            $region112: #{tpu_custom_call.1} parent=104 // loop_exit
              _
          $region105: #{tpu_custom_call.1} parent=92 // pred_fallthru
            _
          // Predicated region
          $region124: #{tpu_custom_call.1} parent=92 // pred_check
            _
          $region125: #{tpu_custom_call.1} parent=92 // pred_check_branch
            %522 = sbr.rel (0) target = $region127
          $region126: #{tpu_custom_call.1} parent=92 // pred_region
            %523 = vsyncadd [#allocation3], 16
          $region127: #{tpu_custom_call.1} parent=92 // pred_fallthru
            _
          %s524 = sadd.s32 %s477, 1
          %s525 = sld [smem:[#allocation7 + %s524]]
          %s526 = scalar_lea.vmem %s1, %s525
          %s527 = scalar_lea.vmem [#allocation2], 1
          %s528 = scalar_lea.sflag [#allocation3], 1
          %p530 = scmp.lt.u32.totalorder 1, 8
          %p531 = pneg %p530
          // Predicated region
          $region128: #{tpu_custom_call.1} parent=92 // pred_check
            _
          $region129: #{tpu_custom_call.1} parent=92 // pred_check_branch
            %533 = sbr.rel (%p530) target = $region131
          $region130: #{tpu_custom_call.1} parent=92 // pred_region
            %s548 = sand.u32 1, 7
            %p549 = scmp.eq.s32.totalorder %s548, 0
            %p550 = pneg %p549
            // Predicated region
            $region143: #{tpu_custom_call.1} parent=130 // pred_check
              _
            $region144: #{tpu_custom_call.1} parent=130 // pred_check_branch
              %552 = sbr.rel (%p549) target = $region146
            $region145: #{tpu_custom_call.1} parent=130 // pred_region
              %s553 = sand.u32 1, 7
              %s554 = ssub.s32 1, %s553
              %s555 = scalar_lea.vmem %s526, %s554
              %s556 = ssub.s32 1, %s553
              %s557 = scalar_lea.vmem %s527, %s556 [#allocation2]
              %s558 = sshllo.u32 0, %s553
              loop: start=0, step=1, limit=1
              $region147: #{tpu_custom_call.1} parent=145 // loop_pre_header
                _
              $region148: #{tpu_custom_call.1} parent=145 // loop_header
                %s560 = sphi 0, %s564
                %p561 = scmp.ge.s32.totalorder %s560, 1
                %s565 = sphi %s555, %s555
                %s566 = sphi %s557, %s557
              $region149: #{tpu_custom_call.1} parent=145 // loop_header_branch
                %563 = sbr.rel (%p561) target = $region153
              $region150: #{tpu_custom_call.1} parent=145 // loop_body
                %v567 = vld [vmem:[%s565] sm:%s558]
                %568 = vst [vmem:[%s566] sm:%s558] %v567
              $region151: #{tpu_custom_call.1} parent=145 // loop_footer
                %s564 = sadd.s32 1, %s560
              $region152: #{tpu_custom_call.1} parent=145 // loop_footer_branch
                %559 = sbr.rel target = $region148
              $region153: #{tpu_custom_call.1} parent=145 // loop_exit
                _
            $region146: #{tpu_custom_call.1} parent=130 // pred_fallthru
              _
          $region131: #{tpu_custom_call.1} parent=92 // pred_fallthru
            _
          // Predicated region
          $region132: #{tpu_custom_call.1} parent=92 // pred_check
            %p534 = pneg %p530
          $region133: #{tpu_custom_call.1} parent=92 // pred_check_branch
            %536 = sbr.rel (%p534) target = $region135
          $region134: #{tpu_custom_call.1} parent=92 // pred_region
            %s537 = sshllo.u32 0, 1
            loop: start=0, step=1, limit=1
            $region136: #{tpu_custom_call.1} parent=134 // loop_pre_header
              _
            $region137: #{tpu_custom_call.1} parent=134 // loop_header
              %s539 = sphi 0, %s543
              %p540 = scmp.ge.s32.totalorder %s539, 1
              %s544 = sphi %s526, %s526
              %s545 = sphi %s527, %s527
            $region138: #{tpu_custom_call.1} parent=134 // loop_header_branch
              %542 = sbr.rel (%p540) target = $region142
            $region139: #{tpu_custom_call.1} parent=134 // loop_body
              %v546 = vld [vmem:[%s544] sm:%s537]
              %547 = vst [vmem:[%s545] sm:%s537] %v546
            $region140: #{tpu_custom_call.1} parent=134 // loop_footer
              %s543 = sadd.s32 1, %s539
            $region141: #{tpu_custom_call.1} parent=134 // loop_footer_branch
              %538 = sbr.rel target = $region137
            $region142: #{tpu_custom_call.1} parent=134 // loop_exit
              _
          $region135: #{tpu_custom_call.1} parent=92 // pred_fallthru
            _
          // Predicated region
          $region154: #{tpu_custom_call.1} parent=92 // pred_check
            _
          $region155: #{tpu_custom_call.1} parent=92 // pred_check_branch
            %571 = sbr.rel (0) target = $region157
          $region156: #{tpu_custom_call.1} parent=92 // pred_region
            %572 = vsyncadd %s528, 16
          $region157: #{tpu_custom_call.1} parent=92 // pred_fallthru
            _
          %s573 = sadd.s32 %s477, 2
          %s574 = sld [smem:[#allocation7 + %s573]]
          %s575 = scalar_lea.vmem %s1, %s574
          %s576 = scalar_lea.vmem [#allocation2], 2
          %s577 = scalar_lea.sflag [#allocation3], 2
          %p579 = scmp.lt.u32.totalorder 1, 8
          %p580 = pneg %p579
          // Predicated region
          $region158: #{tpu_custom_call.1} parent=92 // pred_check
            _
          $region159: #{tpu_custom_call.1} parent=92 // pred_check_branch
            %582 = sbr.rel (%p579) target = $region161
          $region160: #{tpu_custom_call.1} parent=92 // pred_region
            %s597 = sand.u32 1, 7
            %p598 = scmp.eq.s32.totalorder %s597, 0
            %p599 = pneg %p598
            // Predicated region
            $region173: #{tpu_custom_call.1} parent=160 // pred_check
              _
            $region174: #{tpu_custom_call.1} parent=160 // pred_check_branch
              %601 = sbr.rel (%p598) target = $region176
            $region175: #{tpu_custom_call.1} parent=160 // pred_region
              %s602 = sand.u32 1, 7
              %s603 = ssub.s32 1, %s602
              %s604 = scalar_lea.vmem %s575, %s603
              %s605 = ssub.s32 1, %s602
              %s606 = scalar_lea.vmem %s576, %s605 [#allocation2]
              %s607 = sshllo.u32 0, %s602
              loop: start=0, step=1, limit=1
              $region177: #{tpu_custom_call.1} parent=175 // loop_pre_header
                _
              $region178: #{tpu_custom_call.1} parent=175 // loop_header
                %s609 = sphi 0, %s613
                %p610 = scmp.ge.s32.totalorder %s609, 1
                %s614 = sphi %s604, %s604
                %s615 = sphi %s606, %s606
              $region179: #{tpu_custom_call.1} parent=175 // loop_header_branch
                %612 = sbr.rel (%p610) target = $region183
              $region180: #{tpu_custom_call.1} parent=175 // loop_body
                %v616 = vld [vmem:[%s614] sm:%s607]
                %617 = vst [vmem:[%s615] sm:%s607] %v616
              $region181: #{tpu_custom_call.1} parent=175 // loop_footer
                %s613 = sadd.s32 1, %s609
              $region182: #{tpu_custom_call.1} parent=175 // loop_footer_branch
                %608 = sbr.rel target = $region178
              $region183: #{tpu_custom_call.1} parent=175 // loop_exit
                _
            $region176: #{tpu_custom_call.1} parent=160 // pred_fallthru
              _
          $region161: #{tpu_custom_call.1} parent=92 // pred_fallthru
            _
          // Predicated region
          $region162: #{tpu_custom_call.1} parent=92 // pred_check
            %p583 = pneg %p579
          $region163: #{tpu_custom_call.1} parent=92 // pred_check_branch
            %585 = sbr.rel (%p583) target = $region165
          $region164: #{tpu_custom_call.1} parent=92 // pred_region
            %s586 = sshllo.u32 0, 1
            loop: start=0, step=1, limit=1
            $region166: #{tpu_custom_call.1} parent=164 // loop_pre_header
              _
            $region167: #{tpu_custom_call.1} parent=164 // loop_header
              %s588 = sphi 0, %s592
              %p589 = scmp.ge.s32.totalorder %s588, 1
              %s593 = sphi %s575, %s575
              %s594 = sphi %s576, %s576
            $region168: #{tpu_custom_call.1} parent=164 // loop_header_branch
              %591 = sbr.rel (%p589) target = $region172
            $region169: #{tpu_custom_call.1} parent=164 // loop_body
              %v595 = vld [vmem:[%s593] sm:%s586]
              %596 = vst [vmem:[%s594] sm:%s586] %v595
            $region170: #{tpu_custom_call.1} parent=164 // loop_footer
              %s592 = sadd.s32 1, %s588
            $region171: #{tpu_custom_call.1} parent=164 // loop_footer_branch
              %587 = sbr.rel target = $region167
            $region172: #{tpu_custom_call.1} parent=164 // loop_exit
              _
          $region165: #{tpu_custom_call.1} parent=92 // pred_fallthru
            _
          // Predicated region
          $region184: #{tpu_custom_call.1} parent=92 // pred_check
            _
          $region185: #{tpu_custom_call.1} parent=92 // pred_check_branch
            %620 = sbr.rel (0) target = $region187
          $region186: #{tpu_custom_call.1} parent=92 // pred_region
            %621 = vsyncadd %s577, 16
          $region187: #{tpu_custom_call.1} parent=92 // pred_fallthru
            _
          %s622 = sadd.s32 %s477, 3
          %s623 = sld [smem:[#allocation7 + %s622]]
          %s624 = scalar_lea.vmem %s1, %s623
          %s625 = scalar_lea.vmem [#allocation2], 3
          %s626 = scalar_lea.sflag [#allocation3], 3
          %p628 = scmp.lt.u32.totalorder 1, 8
          %p629 = pneg %p628
          // Predicated region
          $region188: #{tpu_custom_call.1} parent=92 // pred_check
            _
          $region189: #{tpu_custom_call.1} parent=92 // pred_check_branch
            %631 = sbr.rel (%p628) target = $region191
          $region190: #{tpu_custom_call.1} parent=92 // pred_region
            %s646 = sand.u32 1, 7
            %p647 = scmp.eq.s32.totalorder %s646, 0
            %p648 = pneg %p647
            // Predicated region
            $region203: #{tpu_custom_call.1} parent=190 // pred_check
              _
            $region204: #{tpu_custom_call.1} parent=190 // pred_check_branch
              %650 = sbr.rel (%p647) target = $region206
            $region205: #{tpu_custom_call.1} parent=190 // pred_region
              %s651 = sand.u32 1, 7
              %s652 = ssub.s32 1, %s651
              %s653 = scalar_lea.vmem %s624, %s652
              %s654 = ssub.s32 1, %s651
              %s655 = scalar_lea.vmem %s625, %s654 [#allocation2]
              %s656 = sshllo.u32 0, %s651
              loop: start=0, step=1, limit=1
              $region207: #{tpu_custom_call.1} parent=205 // loop_pre_header
                _
              $region208: #{tpu_custom_call.1} parent=205 // loop_header
                %s658 = sphi 0, %s662
                %p659 = scmp.ge.s32.totalorder %s658, 1
                %s663 = sphi %s653, %s653
                %s664 = sphi %s655, %s655
              $region209: #{tpu_custom_call.1} parent=205 // loop_header_branch
                %661 = sbr.rel (%p659) target = $region213
              $region210: #{tpu_custom_call.1} parent=205 // loop_body
                %v665 = vld [vmem:[%s663] sm:%s656]
                %666 = vst [vmem:[%s664] sm:%s656] %v665
              $region211: #{tpu_custom_call.1} parent=205 // loop_footer
                %s662 = sadd.s32 1, %s658
              $region212: #{tpu_custom_call.1} parent=205 // loop_footer_branch
                %657 = sbr.rel target = $region208
              $region213: #{tpu_custom_call.1} parent=205 // loop_exit
                _
            $region206: #{tpu_custom_call.1} parent=190 // pred_fallthru
              _
          $region191: #{tpu_custom_call.1} parent=92 // pred_fallthru
            _
          // Predicated region
          $region192: #{tpu_custom_call.1} parent=92 // pred_check
            %p632 = pneg %p628
          $region193: #{tpu_custom_call.1} parent=92 // pred_check_branch
            %634 = sbr.rel (%p632) target = $region195
          $region194: #{tpu_custom_call.1} parent=92 // pred_region
            %s635 = sshllo.u32 0, 1
            loop: start=0, step=1, limit=1
            $region196: #{tpu_custom_call.1} parent=194 // loop_pre_header
              _
            $region197: #{tpu_custom_call.1} parent=194 // loop_header
              %s637 = sphi 0, %s641
              %p638 = scmp.ge.s32.totalorder %s637, 1
              %s642 = sphi %s624, %s624
              %s643 = sphi %s625, %s625
            $region198: #{tpu_custom_call.1} parent=194 // loop_header_branch
              %640 = sbr.rel (%p638) target = $region202
            $region199: #{tpu_custom_call.1} parent=194 // loop_body
              %v644 = vld [vmem:[%s642] sm:%s635]
              %645 = vst [vmem:[%s643] sm:%s635] %v644
            $region200: #{tpu_custom_call.1} parent=194 // loop_footer
              %s641 = sadd.s32 1, %s637
            $region201: #{tpu_custom_call.1} parent=194 // loop_footer_branch
              %636 = sbr.rel target = $region197
            $region202: #{tpu_custom_call.1} parent=194 // loop_exit
              _
          $region195: #{tpu_custom_call.1} parent=92 // pred_fallthru
            _
          // Predicated region
          $region214: #{tpu_custom_call.1} parent=92 // pred_check
            _
          $region215: #{tpu_custom_call.1} parent=92 // pred_check_branch
            %669 = sbr.rel (0) target = $region217
          $region216: #{tpu_custom_call.1} parent=92 // pred_region
            %670 = vsyncadd %s626, 16
          $region217: #{tpu_custom_call.1} parent=92 // pred_fallthru
            _
          %s671 = sadd.s32 %s477, 4
          %s672 = sld [smem:[#allocation7 + %s671]]
          %s673 = scalar_lea.vmem %s1, %s672
          %s674 = scalar_lea.vmem [#allocation2], 4
          %s675 = scalar_lea.sflag [#allocation3], 4
          %p677 = scmp.lt.u32.totalorder 1, 8
          %p678 = pneg %p677
          // Predicated region
          $region218: #{tpu_custom_call.1} parent=92 // pred_check
            _
          $region219: #{tpu_custom_call.1} parent=92 // pred_check_branch
            %680 = sbr.rel (%p677) target = $region221
          $region220: #{tpu_custom_call.1} parent=92 // pred_region
            %s695 = sand.u32 1, 7
            %p696 = scmp.eq.s32.totalorder %s695, 0
            %p697 = pneg %p696
            // Predicated region
            $region233: #{tpu_custom_call.1} parent=220 // pred_check
              _
            $region234: #{tpu_custom_call.1} parent=220 // pred_check_branch
              %699 = sbr.rel (%p696) target = $region236
            $region235: #{tpu_custom_call.1} parent=220 // pred_region
              %s700 = sand.u32 1, 7
              %s701 = ssub.s32 1, %s700
              %s702 = scalar_lea.vmem %s673, %s701
              %s703 = ssub.s32 1, %s700
              %s704 = scalar_lea.vmem %s674, %s703 [#allocation2]
              %s705 = sshllo.u32 0, %s700
              loop: start=0, step=1, limit=1
              $region237: #{tpu_custom_call.1} parent=235 // loop_pre_header
                _
              $region238: #{tpu_custom_call.1} parent=235 // loop_header
                %s707 = sphi 0, %s711
                %p708 = scmp.ge.s32.totalorder %s707, 1
                %s712 = sphi %s702, %s702
                %s713 = sphi %s704, %s704
              $region239: #{tpu_custom_call.1} parent=235 // loop_header_branch
                %710 = sbr.rel (%p708) target = $region243
              $region240: #{tpu_custom_call.1} parent=235 // loop_body
                %v714 = vld [vmem:[%s712] sm:%s705]
                %715 = vst [vmem:[%s713] sm:%s705] %v714
              $region241: #{tpu_custom_call.1} parent=235 // loop_footer
                %s711 = sadd.s32 1, %s707
              $region242: #{tpu_custom_call.1} parent=235 // loop_footer_branch
                %706 = sbr.rel target = $region238
              $region243: #{tpu_custom_call.1} parent=235 // loop_exit
                _
            $region236: #{tpu_custom_call.1} parent=220 // pred_fallthru
              _
          $region221: #{tpu_custom_call.1} parent=92 // pred_fallthru
            _
          // Predicated region
          $region222: #{tpu_custom_call.1} parent=92 // pred_check
            %p681 = pneg %p677
          $region223: #{tpu_custom_call.1} parent=92 // pred_check_branch
            %683 = sbr.rel (%p681) target = $region225
          $region224: #{tpu_custom_call.1} parent=92 // pred_region
            %s684 = sshllo.u32 0, 1
            loop: start=0, step=1, limit=1
            $region226: #{tpu_custom_call.1} parent=224 // loop_pre_header
              _
            $region227: #{tpu_custom_call.1} parent=224 // loop_header
              %s686 = sphi 0, %s690
              %p687 = scmp.ge.s32.totalorder %s686, 1
              %s691 = sphi %s673, %s673
              %s692 = sphi %s674, %s674
            $region228: #{tpu_custom_call.1} parent=224 // loop_header_branch
              %689 = sbr.rel (%p687) target = $region232
            $region229: #{tpu_custom_call.1} parent=224 // loop_body
              %v693 = vld [vmem:[%s691] sm:%s684]
              %694 = vst [vmem:[%s692] sm:%s684] %v693
            $region230: #{tpu_custom_call.1} parent=224 // loop_footer
              %s690 = sadd.s32 1, %s686
            $region231: #{tpu_custom_call.1} parent=224 // loop_footer_branch
              %685 = sbr.rel target = $region227
            $region232: #{tpu_custom_call.1} parent=224 // loop_exit
              _
          $region225: #{tpu_custom_call.1} parent=92 // pred_fallthru
            _
          // Predicated region
          $region244: #{tpu_custom_call.1} parent=92 // pred_check
            _
          $region245: #{tpu_custom_call.1} parent=92 // pred_check_branch
            %718 = sbr.rel (0) target = $region247
          $region246: #{tpu_custom_call.1} parent=92 // pred_region
            %719 = vsyncadd %s675, 16
          $region247: #{tpu_custom_call.1} parent=92 // pred_fallthru
            _
          %s720 = sadd.s32 %s477, 5
          %s721 = sld [smem:[#allocation7 + %s720]]
          %s722 = scalar_lea.vmem %s1, %s721
          %s723 = scalar_lea.vmem [#allocation2], 5
          %s724 = scalar_lea.sflag [#allocation3], 5
          %p726 = scmp.lt.u32.totalorder 1, 8
          %p727 = pneg %p726
          // Predicated region
          $region248: #{tpu_custom_call.1} parent=92 // pred_check
            _
          $region249: #{tpu_custom_call.1} parent=92 // pred_check_branch
            %729 = sbr.rel (%p726) target = $region251
          $region250: #{tpu_custom_call.1} parent=92 // pred_region
            %s744 = sand.u32 1, 7
            %p745 = scmp.eq.s32.totalorder %s744, 0
            %p746 = pneg %p745
            // Predicated region
            $region263: #{tpu_custom_call.1} parent=250 // pred_check
              _
            $region264: #{tpu_custom_call.1} parent=250 // pred_check_branch
              %748 = sbr.rel (%p745) target = $region266
            $region265: #{tpu_custom_call.1} parent=250 // pred_region
              %s749 = sand.u32 1, 7
              %s750 = ssub.s32 1, %s749
              %s751 = scalar_lea.vmem %s722, %s750
              %s752 = ssub.s32 1, %s749
              %s753 = scalar_lea.vmem %s723, %s752 [#allocation2]
              %s754 = sshllo.u32 0, %s749
              loop: start=0, step=1, limit=1
              $region267: #{tpu_custom_call.1} parent=265 // loop_pre_header
                _
              $region268: #{tpu_custom_call.1} parent=265 // loop_header
                %s756 = sphi 0, %s760
                %p757 = scmp.ge.s32.totalorder %s756, 1
                %s761 = sphi %s751, %s751
                %s762 = sphi %s753, %s753
              $region269: #{tpu_custom_call.1} parent=265 // loop_header_branch
                %759 = sbr.rel (%p757) target = $region273
              $region270: #{tpu_custom_call.1} parent=265 // loop_body
                %v763 = vld [vmem:[%s761] sm:%s754]
                %764 = vst [vmem:[%s762] sm:%s754] %v763
              $region271: #{tpu_custom_call.1} parent=265 // loop_footer
                %s760 = sadd.s32 1, %s756
              $region272: #{tpu_custom_call.1} parent=265 // loop_footer_branch
                %755 = sbr.rel target = $region268
              $region273: #{tpu_custom_call.1} parent=265 // loop_exit
                _
            $region266: #{tpu_custom_call.1} parent=250 // pred_fallthru
              _
          $region251: #{tpu_custom_call.1} parent=92 // pred_fallthru
            _
          // Predicated region
          $region252: #{tpu_custom_call.1} parent=92 // pred_check
            %p730 = pneg %p726
          $region253: #{tpu_custom_call.1} parent=92 // pred_check_branch
            %732 = sbr.rel (%p730) target = $region255
          $region254: #{tpu_custom_call.1} parent=92 // pred_region
            %s733 = sshllo.u32 0, 1
            loop: start=0, step=1, limit=1
            $region256: #{tpu_custom_call.1} parent=254 // loop_pre_header
              _
            $region257: #{tpu_custom_call.1} parent=254 // loop_header
              %s735 = sphi 0, %s739
              %p736 = scmp.ge.s32.totalorder %s735, 1
              %s740 = sphi %s722, %s722
              %s741 = sphi %s723, %s723
            $region258: #{tpu_custom_call.1} parent=254 // loop_header_branch
              %738 = sbr.rel (%p736) target = $region262
            $region259: #{tpu_custom_call.1} parent=254 // loop_body
              %v742 = vld [vmem:[%s740] sm:%s733]
              %743 = vst [vmem:[%s741] sm:%s733] %v742
            $region260: #{tpu_custom_call.1} parent=254 // loop_footer
              %s739 = sadd.s32 1, %s735
            $region261: #{tpu_custom_call.1} parent=254 // loop_footer_branch
              %734 = sbr.rel target = $region257
            $region262: #{tpu_custom_call.1} parent=254 // loop_exit
              _
          $region255: #{tpu_custom_call.1} parent=92 // pred_fallthru
            _
          // Predicated region
          $region274: #{tpu_custom_call.1} parent=92 // pred_check
            _
          $region275: #{tpu_custom_call.1} parent=92 // pred_check_branch
            %767 = sbr.rel (0) target = $region277
          $region276: #{tpu_custom_call.1} parent=92 // pred_region
            %768 = vsyncadd %s724, 16
          $region277: #{tpu_custom_call.1} parent=92 // pred_fallthru
            _
          %s769 = sadd.s32 %s477, 6
          %s770 = sld [smem:[#allocation7 + %s769]]
          %s771 = scalar_lea.vmem %s1, %s770
          %s772 = scalar_lea.vmem [#allocation2], 6
          %s773 = scalar_lea.sflag [#allocation3], 6
          %p775 = scmp.lt.u32.totalorder 1, 8
          %p776 = pneg %p775
          // Predicated region
          $region278: #{tpu_custom_call.1} parent=92 // pred_check
            _
          $region279: #{tpu_custom_call.1} parent=92 // pred_check_branch
            %778 = sbr.rel (%p775) target = $region281
          $region280: #{tpu_custom_call.1} parent=92 // pred_region
            %s793 = sand.u32 1, 7
            %p794 = scmp.eq.s32.totalorder %s793, 0
            %p795 = pneg %p794
            // Predicated region
            $region293: #{tpu_custom_call.1} parent=280 // pred_check
              _
            $region294: #{tpu_custom_call.1} parent=280 // pred_check_branch
              %797 = sbr.rel (%p794) target = $region296
            $region295: #{tpu_custom_call.1} parent=280 // pred_region
              %s798 = sand.u32 1, 7
              %s799 = ssub.s32 1, %s798
              %s800 = scalar_lea.vmem %s771, %s799
              %s801 = ssub.s32 1, %s798
              %s802 = scalar_lea.vmem %s772, %s801 [#allocation2]
              %s803 = sshllo.u32 0, %s798
              loop: start=0, step=1, limit=1
              $region297: #{tpu_custom_call.1} parent=295 // loop_pre_header
                _
              $region298: #{tpu_custom_call.1} parent=295 // loop_header
                %s805 = sphi 0, %s809
                %p806 = scmp.ge.s32.totalorder %s805, 1
                %s810 = sphi %s800, %s800
                %s811 = sphi %s802, %s802
              $region299: #{tpu_custom_call.1} parent=295 // loop_header_branch
                %808 = sbr.rel (%p806) target = $region303
              $region300: #{tpu_custom_call.1} parent=295 // loop_body
                %v812 = vld [vmem:[%s810] sm:%s803]
                %813 = vst [vmem:[%s811] sm:%s803] %v812
              $region301: #{tpu_custom_call.1} parent=295 // loop_footer
                %s809 = sadd.s32 1, %s805
              $region302: #{tpu_custom_call.1} parent=295 // loop_footer_branch
                %804 = sbr.rel target = $region298
              $region303: #{tpu_custom_call.1} parent=295 // loop_exit
                _
            $region296: #{tpu_custom_call.1} parent=280 // pred_fallthru
              _
          $region281: #{tpu_custom_call.1} parent=92 // pred_fallthru
            _
          // Predicated region
          $region282: #{tpu_custom_call.1} parent=92 // pred_check
            %p779 = pneg %p775
          $region283: #{tpu_custom_call.1} parent=92 // pred_check_branch
            %781 = sbr.rel (%p779) target = $region285
          $region284: #{tpu_custom_call.1} parent=92 // pred_region
            %s782 = sshllo.u32 0, 1
            loop: start=0, step=1, limit=1
            $region286: #{tpu_custom_call.1} parent=284 // loop_pre_header
              _
            $region287: #{tpu_custom_call.1} parent=284 // loop_header
              %s784 = sphi 0, %s788
              %p785 = scmp.ge.s32.totalorder %s784, 1
              %s789 = sphi %s771, %s771
              %s790 = sphi %s772, %s772
            $region288: #{tpu_custom_call.1} parent=284 // loop_header_branch
              %787 = sbr.rel (%p785) target = $region292
            $region289: #{tpu_custom_call.1} parent=284 // loop_body
              %v791 = vld [vmem:[%s789] sm:%s782]
              %792 = vst [vmem:[%s790] sm:%s782] %v791
            $region290: #{tpu_custom_call.1} parent=284 // loop_footer
              %s788 = sadd.s32 1, %s784
            $region291: #{tpu_custom_call.1} parent=284 // loop_footer_branch
              %783 = sbr.rel target = $region287
            $region292: #{tpu_custom_call.1} parent=284 // loop_exit
              _
          $region285: #{tpu_custom_call.1} parent=92 // pred_fallthru
            _
          // Predicated region
          $region304: #{tpu_custom_call.1} parent=92 // pred_check
            _
          $region305: #{tpu_custom_call.1} parent=92 // pred_check_branch
            %816 = sbr.rel (0) target = $region307
          $region306: #{tpu_custom_call.1} parent=92 // pred_region
            %817 = vsyncadd %s773, 16
          $region307: #{tpu_custom_call.1} parent=92 // pred_fallthru
            _
          %s818 = sadd.s32 %s477, 7
          %s819 = sld [smem:[#allocation7 + %s818]]
          %s820 = scalar_lea.vmem %s1, %s819
          %s821 = scalar_lea.vmem [#allocation2], 7
          %s822 = scalar_lea.sflag [#allocation3], 7
          %p824 = scmp.lt.u32.totalorder 1, 8
          %p825 = pneg %p824
          // Predicated region
          $region308: #{tpu_custom_call.1} parent=92 // pred_check
            _
          $region309: #{tpu_custom_call.1} parent=92 // pred_check_branch
            %827 = sbr.rel (%p824) target = $region311
          $region310: #{tpu_custom_call.1} parent=92 // pred_region
            %s842 = sand.u32 1, 7
            %p843 = scmp.eq.s32.totalorder %s842, 0
            %p844 = pneg %p843
            // Predicated region
            $region323: #{tpu_custom_call.1} parent=310 // pred_check
              _
            $region324: #{tpu_custom_call.1} parent=310 // pred_check_branch
              %846 = sbr.rel (%p843) target = $region326
            $region325: #{tpu_custom_call.1} parent=310 // pred_region
              %s847 = sand.u32 1, 7
              %s848 = ssub.s32 1, %s847
              %s849 = scalar_lea.vmem %s820, %s848
              %s850 = ssub.s32 1, %s847
              %s851 = scalar_lea.vmem %s821, %s850 [#allocation2]
              %s852 = sshllo.u32 0, %s847
              loop: start=0, step=1, limit=1
              $region327: #{tpu_custom_call.1} parent=325 // loop_pre_header
                _
              $region328: #{tpu_custom_call.1} parent=325 // loop_header
                %s854 = sphi 0, %s858
                %p855 = scmp.ge.s32.totalorder %s854, 1
                %s859 = sphi %s849, %s849
                %s860 = sphi %s851, %s851
              $region329: #{tpu_custom_call.1} parent=325 // loop_header_branch
                %857 = sbr.rel (%p855) target = $region333
              $region330: #{tpu_custom_call.1} parent=325 // loop_body
                %v861 = vld [vmem:[%s859] sm:%s852]
                %862 = vst [vmem:[%s860] sm:%s852] %v861
              $region331: #{tpu_custom_call.1} parent=325 // loop_footer
                %s858 = sadd.s32 1, %s854
              $region332: #{tpu_custom_call.1} parent=325 // loop_footer_branch
                %853 = sbr.rel target = $region328
              $region333: #{tpu_custom_call.1} parent=325 // loop_exit
                _
            $region326: #{tpu_custom_call.1} parent=310 // pred_fallthru
              _
          $region311: #{tpu_custom_call.1} parent=92 // pred_fallthru
            _
          // Predicated region
          $region312: #{tpu_custom_call.1} parent=92 // pred_check
            %p828 = pneg %p824
          $region313: #{tpu_custom_call.1} parent=92 // pred_check_branch
            %830 = sbr.rel (%p828) target = $region315
          $region314: #{tpu_custom_call.1} parent=92 // pred_region
            %s831 = sshllo.u32 0, 1
            loop: start=0, step=1, limit=1
            $region316: #{tpu_custom_call.1} parent=314 // loop_pre_header
              _
            $region317: #{tpu_custom_call.1} parent=314 // loop_header
              %s833 = sphi 0, %s837
              %p834 = scmp.ge.s32.totalorder %s833, 1
              %s838 = sphi %s820, %s820
              %s839 = sphi %s821, %s821
            $region318: #{tpu_custom_call.1} parent=314 // loop_header_branch
              %836 = sbr.rel (%p834) target = $region322
            $region319: #{tpu_custom_call.1} parent=314 // loop_body
              %v840 = vld [vmem:[%s838] sm:%s831]
              %841 = vst [vmem:[%s839] sm:%s831] %v840
            $region320: #{tpu_custom_call.1} parent=314 // loop_footer
              %s837 = sadd.s32 1, %s833
            $region321: #{tpu_custom_call.1} parent=314 // loop_footer_branch
              %832 = sbr.rel target = $region317
            $region322: #{tpu_custom_call.1} parent=314 // loop_exit
              _
          $region315: #{tpu_custom_call.1} parent=92 // pred_fallthru
            _
          // Predicated region
          $region334: #{tpu_custom_call.1} parent=92 // pred_check
            _
          $region335: #{tpu_custom_call.1} parent=92 // pred_check_branch
            %865 = sbr.rel (0) target = $region337
          $region336: #{tpu_custom_call.1} parent=92 // pred_region
            %866 = vsyncadd %s822, 16
          $region337: #{tpu_custom_call.1} parent=92 // pred_fallthru
            _
          %s867 = smul.u32 1, 1
          %s868 = sshll.u32 %s867, 4
          %869 = dma.done [#allocation3], %s868
          %s870 = sshll.u32 %s867, 4
          %871 = dma.done %s528, %s870
          %s872 = sshll.u32 %s867, 4
          %873 = dma.done %s577, %s872
          %s874 = sshll.u32 %s867, 4
          %875 = dma.done %s626, %s874
          %s876 = sshll.u32 %s867, 4
          %877 = dma.done %s675, %s876
          %s878 = sshll.u32 %s867, 4
          %879 = dma.done %s724, %s878
          %s880 = sshll.u32 %s867, 4
          %881 = dma.done %s773, %s880
          %s882 = sshll.u32 %s867, 4
          %883 = dma.done %s822, %s882
          %v884 = vld [vmem:[#allocation2] sm:$0xff]
          %v885 = vpack.c.bf16 %v884, %v884
          %v886 = vld [vmem:[#allocation4] sm:$0xff]
          %v887 = vpack.c.bf16 %v886, %v886
          %v888 = vld [vmem:[%s4] sm:$0xff]
          %v889 = vld [vmem:[%s4 + $0x8] sm:$0xff]
          %v890 = vld [vmem:[%s4 + $0x10] sm:$0xff]
          %v891 = vld [vmem:[%s4 + $0x18] sm:$0xff]
          %v892 = vld [vmem:[%s4 + $0x20] sm:$0xff]
          %v893 = vld [vmem:[%s4 + $0x28] sm:$0xff]
          %v894 = vld [vmem:[%s4 + $0x30] sm:$0xff]
          %v895 = vld [vmem:[%s4 + $0x38] sm:$0xff]
          %v896 = vld [vmem:[%s4 + $0x40] sm:$0xff]
          %v897 = vld [vmem:[%s4 + $0x48] sm:$0xff]
          %v898 = vld [vmem:[%s4 + $0x50] sm:$0xff]
          %v899 = vld [vmem:[%s4 + $0x58] sm:$0xff]
          %v900 = vld [vmem:[%s4 + $0x60] sm:$0xff]
          %v901 = vld [vmem:[%s4 + $0x68] sm:$0xff]
          %v902 = vld [vmem:[%s4 + $0x70] sm:$0xff]
          %v903 = vld [vmem:[%s4 + $0x78] sm:$0xff]
          %v904 = vld [vmem:[%s5] sm:$0xff]
          %v905 = vld [vmem:[%s5 + $0x8] sm:$0xff]
          %v906 = vld [vmem:[%s5 + $0x10] sm:$0xff]
          %v907 = vld [vmem:[%s5 + $0x18] sm:$0xff]
          %v908 = vld [vmem:[%s5 + $0x20] sm:$0xff]
          %v909 = vld [vmem:[%s5 + $0x28] sm:$0xff]
          %v910 = vld [vmem:[%s5 + $0x30] sm:$0xff]
          %v911 = vld [vmem:[%s5 + $0x38] sm:$0xff]
          %v912 = vld [vmem:[%s5 + $0x40] sm:$0xff]
          %v913 = vld [vmem:[%s5 + $0x48] sm:$0xff]
          %v914 = vld [vmem:[%s5 + $0x50] sm:$0xff]
          %v915 = vld [vmem:[%s5 + $0x58] sm:$0xff]
          %v916 = vld [vmem:[%s5 + $0x60] sm:$0xff]
          %v917 = vld [vmem:[%s5 + $0x68] sm:$0xff]
          %v918 = vld [vmem:[%s5 + $0x70] sm:$0xff]
          %v919 = vld [vmem:[%s5 + $0x78] sm:$0xff]
          %v920 = vld [vmem:[%s5 + $0x80] sm:$0xff]
          %v921 = vld [vmem:[%s5 + $0x88] sm:$0xff]
          %v922 = vld [vmem:[%s5 + $0x90] sm:$0xff]
          %v923 = vld [vmem:[%s5 + $0x98] sm:$0xff]
          %v924 = vld [vmem:[%s5 + $0xa0] sm:$0xff]
          %v925 = vld [vmem:[%s5 + $0xa8] sm:$0xff]
          %v926 = vld [vmem:[%s5 + $0xb0] sm:$0xff]
          %v927 = vld [vmem:[%s5 + $0xb8] sm:$0xff]
          %v928 = vld [vmem:[%s5 + $0xc0] sm:$0xff]
          %v929 = vld [vmem:[%s5 + $0xc8] sm:$0xff]
          %v930 = vld [vmem:[%s5 + $0xd0] sm:$0xff]
          %v931 = vld [vmem:[%s5 + $0xd8] sm:$0xff]
          %v932 = vld [vmem:[%s5 + $0xe0] sm:$0xff]
          %v933 = vld [vmem:[%s5 + $0xe8] sm:$0xff]
          %v934 = vld [vmem:[%s5 + $0xf0] sm:$0xff]
          %v935 = vld [vmem:[%s5 + $0xf8] sm:$0xff]
          %v968 = vunpack.c.l.b16 %v904
          %v969 = vunpack.c.h.b16 %v904
          %v970 = vunpack.c.l.b16 %v905
          %v971 = vunpack.c.h.b16 %v905
          %v972 = vunpack.c.l.b16 %v906
          %v973 = vunpack.c.h.b16 %v906
          %v974 = vunpack.c.l.b16 %v907
          %v975 = vunpack.c.h.b16 %v907
          %v976 = vunpack.c.l.b16 %v908
          %v977 = vunpack.c.h.b16 %v908
          %v978 = vunpack.c.l.b16 %v909
          %v979 = vunpack.c.h.b16 %v909
          %v980 = vunpack.c.l.b16 %v910
          %v981 = vunpack.c.h.b16 %v910
          %v982 = vunpack.c.l.b16 %v911
          %v983 = vunpack.c.h.b16 %v911
          %v984 = vunpack.c.l.b16 %v912
          %v985 = vunpack.c.h.b16 %v912
          %v986 = vunpack.c.l.b16 %v913
          %v987 = vunpack.c.h.b16 %v913
          %v988 = vunpack.c.l.b16 %v914
          %v989 = vunpack.c.h.b16 %v914
          %v990 = vunpack.c.l.b16 %v915
          %v991 = vunpack.c.h.b16 %v915
          %v992 = vunpack.c.l.b16 %v916
          %v993 = vunpack.c.h.b16 %v916
          %v994 = vunpack.c.l.b16 %v917
          %v995 = vunpack.c.h.b16 %v917
          %v996 = vunpack.c.l.b16 %v918
          %v997 = vunpack.c.h.b16 %v918
          %v998 = vunpack.c.l.b16 %v919
          %v999 = vunpack.c.h.b16 %v919
          %v1000 = vunpack.c.l.b16 %v920
          %v1001 = vunpack.c.h.b16 %v920
          %v1002 = vunpack.c.l.b16 %v921
          %v1003 = vunpack.c.h.b16 %v921
          %v1004 = vunpack.c.l.b16 %v922
          %v1005 = vunpack.c.h.b16 %v922
          %v1006 = vunpack.c.l.b16 %v923
          %v1007 = vunpack.c.h.b16 %v923
          %v1008 = vunpack.c.l.b16 %v924
          %v1009 = vunpack.c.h.b16 %v924
          %v1010 = vunpack.c.l.b16 %v925
          %v1011 = vunpack.c.h.b16 %v925
          %v1012 = vunpack.c.l.b16 %v926
          %v1013 = vunpack.c.h.b16 %v926
          %v1014 = vunpack.c.l.b16 %v927
          %v1015 = vunpack.c.h.b16 %v927
          %v1016 = vunpack.c.l.b16 %v928
          %v1017 = vunpack.c.h.b16 %v928
          %v1018 = vunpack.c.l.b16 %v929
          %v1019 = vunpack.c.h.b16 %v929
          %v1020 = vunpack.c.l.b16 %v930
          %v1021 = vunpack.c.h.b16 %v930
          %v1022 = vunpack.c.l.b16 %v931
          %v1023 = vunpack.c.h.b16 %v931
          %v1024 = vunpack.c.l.b16 %v932
          %v1025 = vunpack.c.h.b16 %v932
          %v1026 = vunpack.c.l.b16 %v933
          %v1027 = vunpack.c.h.b16 %v933
          %v1028 = vunpack.c.l.b16 %v934
          %v1029 = vunpack.c.h.b16 %v934
          %v1030 = vunpack.c.l.b16 %v935
          %v1031 = vunpack.c.h.b16 %v935
          %v1032 = vpack.c.b16 %v972, %v968
          %v1033 = vpack.c.b16 %v973, %v969
          %v1034 = vpack.c.b16 %v974, %v970
          %v1035 = vpack.c.b16 %v975, %v971
          %v1036 = vpack.c.b16 %v980, %v976
          %v1037 = vpack.c.b16 %v981, %v977
          %v1038 = vpack.c.b16 %v982, %v978
          %v1039 = vpack.c.b16 %v983, %v979
          %v1040 = vpack.c.b16 %v988, %v984
          %v1041 = vpack.c.b16 %v989, %v985
          %v1042 = vpack.c.b16 %v990, %v986
          %v1043 = vpack.c.b16 %v991, %v987
          %v1044 = vpack.c.b16 %v996, %v992
          %v1045 = vpack.c.b16 %v997, %v993
          %v1046 = vpack.c.b16 %v998, %v994
          %v1047 = vpack.c.b16 %v999, %v995
          %v1048 = vpack.c.b16 %v1004, %v1000
          %v1049 = vpack.c.b16 %v1005, %v1001
          %v1050 = vpack.c.b16 %v1006, %v1002
          %v1051 = vpack.c.b16 %v1007, %v1003
          %v1052 = vpack.c.b16 %v1012, %v1008
          %v1053 = vpack.c.b16 %v1013, %v1009
          %v1054 = vpack.c.b16 %v1014, %v1010
          %v1055 = vpack.c.b16 %v1015, %v1011
          %v1056 = vpack.c.b16 %v1020, %v1016
          %v1057 = vpack.c.b16 %v1021, %v1017
          %v1058 = vpack.c.b16 %v1022, %v1018
          %v1059 = vpack.c.b16 %v1023, %v1019
          %v1060 = vpack.c.b16 %v1028, %v1024
          %v1061 = vpack.c.b16 %v1029, %v1025
          %v1062 = vpack.c.b16 %v1030, %v1026
          %v1063 = vpack.c.b16 %v1031, %v1027
          %1096 = vmatprep.subr.bf16.mxu0 %v1033
          %1097 = vmatpush1.bf16.msra.mxu0 %v1032
          %1098 = vmatprep.subr.bf16.mxu0 %v1037
          %1099 = vmatpush1.bf16.msra.mxu0 %v1036
          %1100 = vmatprep.subr.bf16.mxu0 %v1041
          %1101 = vmatpush1.bf16.msra.mxu0 %v1040
          %1102 = vmatprep.subr.bf16.mxu0 %v1045
          %1103 = vmatpush1.bf16.msra.mxu0 %v1044
          %1104 = vmatprep.subr.bf16.mxu0 %v1049
          %1105 = vmatpush1.bf16.msra.mxu0 %v1048
          %1106 = vmatprep.subr.bf16.mxu0 %v1053
          %1107 = vmatpush1.bf16.msra.mxu0 %v1052
          %1108 = vmatprep.subr.bf16.mxu0 %v1057
          %1109 = vmatpush1.bf16.msra.mxu0 %v1056
          %1110 = vmatprep.subr.bf16.mxu0 %v1061
          %1111 = vmatpush1.bf16.msra.mxu0 %v1060
          %1112 = vmatprep.subr.bf16.mxu0 0
          %1113 = vmatpush1.bf16.msra.mxu0 0
          %1114 = vmatprep.subr.bf16.mxu0 0
          %1115 = vmatpush1.bf16.msra.mxu0 0
          %1116 = vmatprep.subr.bf16.mxu0 0
          %1117 = vmatpush1.bf16.msra.mxu0 0
          %1118 = vmatprep.subr.bf16.mxu0 0
          %1119 = vmatpush1.bf16.msra.mxu0 0
          %1120 = vmatprep.subr.bf16.mxu0 0
          %1121 = vmatpush1.bf16.msra.mxu0 0
          %1122 = vmatprep.subr.bf16.mxu0 0
          %1123 = vmatpush1.bf16.msra.mxu0 0
          %1124 = vmatprep.subr.bf16.mxu0 0
          %1125 = vmatpush1.bf16.msra.mxu0 0
          %1126 = vmatprep.subr.bf16.mxu0 0
          %1127 = vmatpush1.bf16.msra.mxu0 0
          %1128 = vmatprep.mubr.bf16.mxu0 0
          %1129 = vmatmul.mubr.bf16.gmra.mrb[0].mxu0 %v887
          %v1130 = vpop.f32.mrb[0].mxu0
          %v1131 = vadd.f32 0.0, %v1130
          %v1132 = vpop.f32.mrb[0].mxu0
          %v1133 = vadd.f32 0.0, %v1132
          %v1134 = vpop.f32.mrb[0].mxu0
          %v1135 = vpop.f32.mrb[0].mxu0
          %1136 = vdwg.mxu0
          %1137 = vmatprep.subr.bf16.mxu0 %v1035
          %1138 = vmatpush1.bf16.msra.mxu0 %v1034
          %1139 = vmatprep.subr.bf16.mxu0 %v1039
          %1140 = vmatpush1.bf16.msra.mxu0 %v1038
          %1141 = vmatprep.subr.bf16.mxu0 %v1043
          %1142 = vmatpush1.bf16.msra.mxu0 %v1042
          %1143 = vmatprep.subr.bf16.mxu0 %v1047
          %1144 = vmatpush1.bf16.msra.mxu0 %v1046
          %1145 = vmatprep.subr.bf16.mxu0 %v1051
          %1146 = vmatpush1.bf16.msra.mxu0 %v1050
          %1147 = vmatprep.subr.bf16.mxu0 %v1055
          %1148 = vmatpush1.bf16.msra.mxu0 %v1054
          %1149 = vmatprep.subr.bf16.mxu0 %v1059
          %1150 = vmatpush1.bf16.msra.mxu0 %v1058
          %1151 = vmatprep.subr.bf16.mxu0 %v1063
          %1152 = vmatpush1.bf16.msra.mxu0 %v1062
          %1153 = vmatprep.subr.bf16.mxu0 0
          %1154 = vmatpush1.bf16.msra.mxu0 0
          %1155 = vmatprep.subr.bf16.mxu0 0
          %1156 = vmatpush1.bf16.msra.mxu0 0
          %1157 = vmatprep.subr.bf16.mxu0 0
          %1158 = vmatpush1.bf16.msra.mxu0 0
          %1159 = vmatprep.subr.bf16.mxu0 0
          %1160 = vmatpush1.bf16.msra.mxu0 0
          %1161 = vmatprep.subr.bf16.mxu0 0
          %1162 = vmatpush1.bf16.msra.mxu0 0
          %1163 = vmatprep.subr.bf16.mxu0 0
          %1164 = vmatpush1.bf16.msra.mxu0 0
          %1165 = vmatprep.subr.bf16.mxu0 0
          %1166 = vmatpush1.bf16.msra.mxu0 0
          %1167 = vmatprep.subr.bf16.mxu0 0
          %1168 = vmatpush1.bf16.msra.mxu0 0
          %1169 = vmatprep.mubr.bf16.mxu0 0
          %1170 = vmatmul.mubr.bf16.gmra.mrb[0].mxu0 %v887
          %v1171 = vpop.f32.mrb[0].mxu0
          %v1172 = vadd.f32 0.0, %v1171
          %v1173 = vpop.f32.mrb[0].mxu0
          %v1174 = vadd.f32 0.0, %v1173
          %v1175 = vpop.f32.mrb[0].mxu0
          %v1176 = vpop.f32.mrb[0].mxu0
          %1177 = vdwg.mxu0
          %v1194 = vunpack.c.l.b16 %v888
          %v1195 = vunpack.c.h.b16 %v888
          %v1196 = vunpack.c.l.b16 %v889
          %v1197 = vunpack.c.h.b16 %v889
          %v1198 = vunpack.c.l.b16 %v890
          %v1199 = vunpack.c.h.b16 %v890
          %v1200 = vunpack.c.l.b16 %v891
          %v1201 = vunpack.c.h.b16 %v891
          %v1202 = vunpack.c.l.b16 %v892
          %v1203 = vunpack.c.h.b16 %v892
          %v1204 = vunpack.c.l.b16 %v893
          %v1205 = vunpack.c.h.b16 %v893
          %v1206 = vunpack.c.l.b16 %v894
          %v1207 = vunpack.c.h.b16 %v894
          %v1208 = vunpack.c.l.b16 %v895
          %v1209 = vunpack.c.h.b16 %v895
          %v1210 = vunpack.c.l.b16 %v896
          %v1211 = vunpack.c.h.b16 %v896
          %v1212 = vunpack.c.l.b16 %v897
          %v1213 = vunpack.c.h.b16 %v897
          %v1214 = vunpack.c.l.b16 %v898
          %v1215 = vunpack.c.h.b16 %v898
          %v1216 = vunpack.c.l.b16 %v899
          %v1217 = vunpack.c.h.b16 %v899
          %v1218 = vunpack.c.l.b16 %v900
          %v1219 = vunpack.c.h.b16 %v900
          %v1220 = vunpack.c.l.b16 %v901
          %v1221 = vunpack.c.h.b16 %v901
          %v1222 = vunpack.c.l.b16 %v902
          %v1223 = vunpack.c.h.b16 %v902
          %v1224 = vunpack.c.l.b16 %v903
          %v1225 = vunpack.c.h.b16 %v903
          %v1226 = vpack.c.b16 %v1198, %v1194
          %v1227 = vpack.c.b16 %v1199, %v1195
          %v1228 = vpack.c.b16 %v1200, %v1196
          %v1229 = vpack.c.b16 %v1201, %v1197
          %v1230 = vpack.c.b16 %v1206, %v1202
          %v1231 = vpack.c.b16 %v1207, %v1203
          %v1232 = vpack.c.b16 %v1208, %v1204
          %v1233 = vpack.c.b16 %v1209, %v1205
          %v1234 = vpack.c.b16 %v1214, %v1210
          %v1235 = vpack.c.b16 %v1215, %v1211
          %v1236 = vpack.c.b16 %v1216, %v1212
          %v1237 = vpack.c.b16 %v1217, %v1213
          %v1238 = vpack.c.b16 %v1222, %v1218
          %v1239 = vpack.c.b16 %v1223, %v1219
          %v1240 = vpack.c.b16 %v1224, %v1220
          %v1241 = vpack.c.b16 %v1225, %v1221
          %vm1258 = vcmask 523264
          %v1260 = vsel %vm1258, %v885, 0
          %1262 = vmatprep.subr.bf16.mxu0 %v1227
          %1263 = vmatpush1.bf16.msra.mxu0 %v1226
          %1264 = vmatprep.subr.bf16.mxu0 %v1231
          %1265 = vmatpush1.bf16.msra.mxu0 %v1230
          %1266 = vmatprep.subr.bf16.mxu0 %v1235
          %1267 = vmatpush1.bf16.msra.mxu0 %v1234
          %1268 = vmatprep.subr.bf16.mxu0 %v1239
          %1269 = vmatpush1.bf16.msra.mxu0 %v1238
          %1270 = vmatprep.subr.bf16.mxu0 0
          %1271 = vmatpush1.bf16.msra.mxu0 0
          %1272 = vmatprep.subr.bf16.mxu0 0
          %1273 = vmatpush1.bf16.msra.mxu0 0
          %1274 = vmatprep.subr.bf16.mxu0 0
          %1275 = vmatpush1.bf16.msra.mxu0 0
          %1276 = vmatprep.subr.bf16.mxu0 0
          %1277 = vmatpush1.bf16.msra.mxu0 0
          %1278 = vmatprep.subr.bf16.mxu0 0
          %1279 = vmatpush1.bf16.msra.mxu0 0
          %1280 = vmatprep.subr.bf16.mxu0 0
          %1281 = vmatpush1.bf16.msra.mxu0 0
          %1282 = vmatprep.subr.bf16.mxu0 0
          %1283 = vmatpush1.bf16.msra.mxu0 0
          %1284 = vmatprep.subr.bf16.mxu0 0
          %1285 = vmatpush1.bf16.msra.mxu0 0
          %1286 = vmatprep.subr.bf16.mxu0 0
          %1287 = vmatpush1.bf16.msra.mxu0 0
          %1288 = vmatprep.subr.bf16.mxu0 0
          %1289 = vmatpush1.bf16.msra.mxu0 0
          %1290 = vmatprep.subr.bf16.mxu0 0
          %1291 = vmatpush1.bf16.msra.mxu0 0
          %1292 = vmatprep.subr.bf16.mxu0 0
          %1293 = vmatpush1.bf16.msra.mxu0 0
          %1294 = vmatprep.mubr.bf16.mxu0 0
          %1295 = vmatmul.mubr.bf16.gmra.mrb[0].mxu0 %v1260
          %v1296 = vpop.f32.mrb[0].mxu0
          %v1297 = vadd.f32 %v1131, %v1296
          %v1298 = vpop.f32.mrb[0].mxu0
          %v1299 = vadd.f32 %v1133, %v1298
          %v1300 = vpop.f32.mrb[0].mxu0
          %v1301 = vpop.f32.mrb[0].mxu0
          %1302 = vdwg.mxu0
          %1303 = vmatprep.subr.bf16.mxu0 %v1229
          %1304 = vmatpush1.bf16.msra.mxu0 %v1228
          %1305 = vmatprep.subr.bf16.mxu0 %v1233
          %1306 = vmatpush1.bf16.msra.mxu0 %v1232
          %1307 = vmatprep.subr.bf16.mxu0 %v1237
          %1308 = vmatpush1.bf16.msra.mxu0 %v1236
          %1309 = vmatprep.subr.bf16.mxu0 %v1241
          %1310 = vmatpush1.bf16.msra.mxu0 %v1240
          %1311 = vmatprep.subr.bf16.mxu0 0
          %1312 = vmatpush1.bf16.msra.mxu0 0
          %1313 = vmatprep.subr.bf16.mxu0 0
          %1314 = vmatpush1.bf16.msra.mxu0 0
          %1315 = vmatprep.subr.bf16.mxu0 0
          %1316 = vmatpush1.bf16.msra.mxu0 0
          %1317 = vmatprep.subr.bf16.mxu0 0
          %1318 = vmatpush1.bf16.msra.mxu0 0
          %1319 = vmatprep.subr.bf16.mxu0 0
          %1320 = vmatpush1.bf16.msra.mxu0 0
          %1321 = vmatprep.subr.bf16.mxu0 0
          %1322 = vmatpush1.bf16.msra.mxu0 0
          %1323 = vmatprep.subr.bf16.mxu0 0
          %1324 = vmatpush1.bf16.msra.mxu0 0
          %1325 = vmatprep.subr.bf16.mxu0 0
          %1326 = vmatpush1.bf16.msra.mxu0 0
          %1327 = vmatprep.subr.bf16.mxu0 0
          %1328 = vmatpush1.bf16.msra.mxu0 0
          %1329 = vmatprep.subr.bf16.mxu0 0
          %1330 = vmatpush1.bf16.msra.mxu0 0
          %1331 = vmatprep.subr.bf16.mxu0 0
          %1332 = vmatpush1.bf16.msra.mxu0 0
          %1333 = vmatprep.subr.bf16.mxu0 0
          %1334 = vmatpush1.bf16.msra.mxu0 0
          %1335 = vmatprep.mubr.bf16.mxu0 0
          %1336 = vmatmul.mubr.bf16.gmra.mrb[0].mxu0 %v1260
          %v1337 = vpop.f32.mrb[0].mxu0
          %v1338 = vadd.f32 %v1172, %v1337
          %v1339 = vpop.f32.mrb[0].mxu0
          %v1340 = vadd.f32 %v1174, %v1339
          %v1341 = vpop.f32.mrb[0].mxu0
          %v1342 = vpop.f32.mrb[0].mxu0
          %1343 = vdwg.mxu0
          %v1344 = vld [vmem:[%s6] sm:$0xf]
          %v1346 = vlaneseq
          %v1347 = vshrl.u32 %v1346, 7
          %v1348 = vsub.s32 0, %v1347
          %v1349 = vrot.slane %v1344, %v1348
          %v1350 = vlaneseq
          %v1351 = vshrl.u32 %v1350, 7
          %v1352 = vsub.s32 1, %v1351
          %v1353 = vrot.slane %v1344, %v1352
          %v1354 = vlaneseq
          %v1355 = vshrl.u32 %v1354, 7
          %v1356 = vsub.s32 2, %v1355
          %v1357 = vrot.slane %v1344, %v1356
          %v1358 = vlaneseq
          %v1359 = vshrl.u32 %v1358, 7
          %v1360 = vsub.s32 3, %v1359
          %v1361 = vrot.slane %v1344, %v1360
          %v1366 = vadd.f32 %v1297, %v1349
          %v1367 = vadd.f32 %v1299, %v1353
          %v1368 = vadd.f32 %v1338, %v1357
          %v1369 = vadd.f32 %v1340, %v1361
          %v1370 = vxor.u32 %v1366, 2147483648
          %v1371 = vmul.f32 %v1370, 1.442695
          %v1372 = vpow.pop %v1371
          %v1373 = vadd.f32 %v1372, 1.0
          %v1374 = vrcp.pop %v1373
          %v1375 = vmul.f32 1.0, %v1374
          %v1376 = vxor.u32 %v1367, 2147483648
          %v1377 = vmul.f32 %v1376, 1.442695
          %v1378 = vpow.pop %v1377
          %v1379 = vadd.f32 %v1378, 1.0
          %v1380 = vrcp.pop %v1379
          %v1381 = vmul.f32 1.0, %v1380
          %v1382 = vtanh.pop %v1368
          %v1383 = vxor.u32 %v1369, 2147483648
          %v1384 = vmul.f32 %v1383, 1.442695
          %v1385 = vpow.pop %v1384
          %v1386 = vadd.f32 %v1385, 1.0
          %v1387 = vrcp.pop %v1386
          %v1388 = vmul.f32 1.0, %v1387
          %v1389 = vld [vmem:[#allocation5] sm:$0xff]
          %v1390 = vmul.f32 %v1381, %v1389
          %v1391 = vmul.f32 %v1375, %v1382
          %v1392 = vadd.f32 %v1390, %v1391
          %v1393 = vtanh.pop %v1392
          %v1394 = vmul.f32 %v1388, %v1393
          %1395 = vst [vmem:[#allocation4] sm:$0xff] %v1394
          %1396 = vst [vmem:[#allocation5] sm:$0xff] %v1392
          %1397 = vst [vmem:[#allocation11] sm:$0xff] %v1394
          %1398 = vst [vmem:[#allocation13] sm:$0xff] %v1392
        $region93: #{tpu_custom_call.1} parent=84 // pred_fallthru
          _
        %v1399 = vld [vmem:[#allocation4] sm:$0xff]
        %v1400 = vpack.c.bf16 %v1399, %v1399
        %v1401 = vld [vmem:[%s425] sm:$0xf]
        %v1402 = vld [vmem:[%s425 + $0x4] sm:$0xf]
        %v1403 = vld [vmem:[%s425 + $0x8] sm:$0xf]
        %v1404 = vld [vmem:[%s425 + $0xc] sm:$0xf]
        %v1405 = vld [vmem:[%s425 + $0x10] sm:$0xf]
        %v1406 = vld [vmem:[%s425 + $0x14] sm:$0xf]
        %v1407 = vld [vmem:[%s425 + $0x18] sm:$0xf]
        %v1408 = vld [vmem:[%s425 + $0x1c] sm:$0xf]
        %v1409 = vld [vmem:[%s425 + $0x20] sm:$0xf]
        %v1410 = vld [vmem:[%s425 + $0x24] sm:$0xf]
        %v1411 = vld [vmem:[%s425 + $0x28] sm:$0xf]
        %v1412 = vld [vmem:[%s425 + $0x2c] sm:$0xf]
        %v1413 = vld [vmem:[%s425 + $0x30] sm:$0xf]
        %v1414 = vld [vmem:[%s425 + $0x34] sm:$0xf]
        %v1415 = vld [vmem:[%s425 + $0x38] sm:$0xf]
        %v1416 = vld [vmem:[%s425 + $0x3c] sm:$0xf]
        %v1417 = vld [vmem:[%s463] sm:$0x1]
        %v1419 = vlaneseq
        %v1420 = vshrl.u32 %v1419, 7
        %v1421 = vsub.s32 0, %v1420
        %v1422 = vrot.slane %v1417, %v1421
        %v1440 = vunpack.c.l.b16 %v1401
        %v1441 = vunpack.c.l.b16 %v1402
        %v1442 = vunpack.c.l.b16 %v1403
        %v1443 = vunpack.c.l.b16 %v1404
        %v1444 = vunpack.c.l.b16 %v1405
        %v1445 = vunpack.c.l.b16 %v1406
        %v1446 = vunpack.c.l.b16 %v1407
        %v1447 = vunpack.c.l.b16 %v1408
        %v1448 = vunpack.c.l.b16 %v1409
        %v1449 = vunpack.c.l.b16 %v1410
        %v1450 = vunpack.c.l.b16 %v1411
        %v1451 = vunpack.c.l.b16 %v1412
        %v1452 = vunpack.c.l.b16 %v1413
        %v1453 = vunpack.c.l.b16 %v1414
        %v1454 = vunpack.c.l.b16 %v1415
        %v1455 = vunpack.c.l.b16 %v1416
        %v1456 = vpack.c.b16 %v1441, %v1440
        %v1457 = vpack.c.b16 %v1443, %v1442
        %v1458 = vpack.c.b16 %v1445, %v1444
        %v1459 = vpack.c.b16 %v1447, %v1446
        %v1460 = vpack.c.b16 %v1449, %v1448
        %v1461 = vpack.c.b16 %v1451, %v1450
        %v1462 = vpack.c.b16 %v1453, %v1452
        %v1463 = vpack.c.b16 %v1455, %v1454
        %1472 = vmatprep.subr.bf16.mxu0 0
        %1473 = vmatpush1.bf16.msra.mxu0 %v1456
        %1474 = vmatprep.subr.bf16.mxu0 0
        %1475 = vmatpush1.bf16.msra.mxu0 %v1457
        %1476 = vmatprep.subr.bf16.mxu0 0
        %1477 = vmatpush1.bf16.msra.mxu0 %v1458
        %1478 = vmatprep.subr.bf16.mxu0 0
        %1479 = vmatpush1.bf16.msra.mxu0 %v1459
        %1480 = vmatprep.subr.bf16.mxu0 0
        %1481 = vmatpush1.bf16.msra.mxu0 %v1460
        %1482 = vmatprep.subr.bf16.mxu0 0
        %1483 = vmatpush1.bf16.msra.mxu0 %v1461
        %1484 = vmatprep.subr.bf16.mxu0 0
        %1485 = vmatpush1.bf16.msra.mxu0 %v1462
        %1486 = vmatprep.subr.bf16.mxu0 0
        %1487 = vmatpush1.bf16.msra.mxu0 %v1463
        %1488 = vmatprep.subr.bf16.mxu0 0
        %1489 = vmatpush1.bf16.msra.mxu0 0
        %1490 = vmatprep.subr.bf16.mxu0 0
        %1491 = vmatpush1.bf16.msra.mxu0 0
        %1492 = vmatprep.subr.bf16.mxu0 0
        %1493 = vmatpush1.bf16.msra.mxu0 0
        %1494 = vmatprep.subr.bf16.mxu0 0
        %1495 = vmatpush1.bf16.msra.mxu0 0
        %1496 = vmatprep.subr.bf16.mxu0 0
        %1497 = vmatpush1.bf16.msra.mxu0 0
        %1498 = vmatprep.subr.bf16.mxu0 0
        %1499 = vmatpush1.bf16.msra.mxu0 0
        %1500 = vmatprep.subr.bf16.mxu0 0
        %1501 = vmatpush1.bf16.msra.mxu0 0
        %1502 = vmatprep.subr.bf16.mxu0 0
        %1503 = vmatpush1.bf16.msra.mxu0 0
        %1504 = vmatprep.mubr.bf16.mxu0 0
        %1505 = vmatmul.mubr.bf16.gmra.mrb[0].mxu0 %v1400
        %v1506 = vpop.f32.mrb[0].mxu0
        %v1507 = vadd.f32 %v1422, %v1506
        %v1508 = vpop.f32.mrb[0].mxu0
        %v1509 = vpop.f32.mrb[0].mxu0
        %v1510 = vpop.f32.mrb[0].mxu0
        %1511 = vdwg.mxu0
        %1512 = vst [vmem:[%s456] sm:$0xff] %v1507
        %s1513 = sand.u32 %s212, 1
        %s1514 = scalar_lea.sflag [#allocation10], %s1513
        %s1515 = sand.u32 %s212, 1
        %s1516 = smul.addr %s1515, 8
        %s1517 = scalar_lea.vmem [#allocation9], %s1516
        // Predicated region
        $region338: #{tpu_custom_call.1} parent=84 // pred_check
          %p1518 = pneg %p222
        $region339: #{tpu_custom_call.1} parent=84 // pred_check_branch
          %1520 = sbr.rel (%p1518) target = $region341
        $region340: #{tpu_custom_call.1} parent=84 // pred_region
          %s1522 = ssub.s32 128, 128
          %1523 = vsyncadd %s1514, %s1522
          %s1524 = smul.addr %s37, 4
          %s1525 = sadd.s32 %s38, %s1524
          %s1526 = smul.addr %s1525, 128
          %s1527 = scalar_lea.hbm %s9, %s1526
          %s1529 = sshll.u32 %s1517, 4
          %s1530 = int_to_ptr.vmem [resolvable:$true] %s1529
          %1532 = dma.vmem_to_hbm [thread:$0]  %s1530, 128, %s1527, %s1514
        $region341: #{tpu_custom_call.1} parent=84 // pred_fallthru
          _
        // Predicated region
        $region342: #{tpu_custom_call.1} parent=84 // pred_check
          %p1533 = pneg %p243
        $region343: #{tpu_custom_call.1} parent=84 // pred_check_branch
          %1535 = sbr.rel (%p1533) target = $region345
        $region344: #{tpu_custom_call.1} parent=84 // pred_region
          %s1537 = ssub.s32 128, 128
          %1538 = vsyncadd [#allocation12], %s1537
          %s1540 = sshll.u32 [#allocation11], 4
          %s1541 = int_to_ptr.vmem [resolvable:$true] %s1540
          %1543 = dma.vmem_to_hbm [thread:$0]  %s1541, 128, %s10, [#allocation12]
        $region345: #{tpu_custom_call.1} parent=84 // pred_fallthru
          _
        // Predicated region
        $region346: #{tpu_custom_call.1} parent=84 // pred_check
          %p1544 = pneg %p264
        $region347: #{tpu_custom_call.1} parent=84 // pred_check_branch
          %1546 = sbr.rel (%p1544) target = $region349
        $region348: #{tpu_custom_call.1} parent=84 // pred_region
          %s1548 = ssub.s32 128, 128
          %1549 = vsyncadd [#allocation12], %s1548
          %s1551 = sshll.u32 [#allocation13], 4
          %s1552 = int_to_ptr.vmem [resolvable:$true] %s1551
          %1554 = dma.vmem_to_hbm [thread:$0]  %s1552, 128, %s11, [#allocation12]
        $region349: #{tpu_custom_call.1} parent=84 // pred_fallthru
          _
        // Predicated region
        $region350: #{tpu_custom_call.1} parent=84 // pred_check
          %p1555 = pneg %p243
        $region351: #{tpu_custom_call.1} parent=84 // pred_check_branch
          %1557 = sbr.rel (%p1555) target = $region353
        $region352: #{tpu_custom_call.1} parent=84 // pred_region
          %1558 = dma.done [#allocation12], 128
        $region353: #{tpu_custom_call.1} parent=84 // pred_fallthru
          _
        // Predicated region
        $region354: #{tpu_custom_call.1} parent=84 // pred_check
          %p1559 = pneg %p264
        $region355: #{tpu_custom_call.1} parent=84 // pred_check_branch
          %1561 = sbr.rel (%p1559) target = $region357
        $region356: #{tpu_custom_call.1} parent=84 // pred_region
          %1562 = dma.done [#allocation12], 128
        $region357: #{tpu_custom_call.1} parent=84 // pred_fallthru
          _
      $region85: #{tpu_custom_call.1} parent=5 // pred_fallthru
        _
      %p1563 = scmp.le.s32.totalorder 2, %s28
      // Predicated region
      $region358: #{tpu_custom_call.1} parent=5 // pred_check
        %p1564 = pneg %p1563
      $region359: #{tpu_custom_call.1} parent=5 // pred_check_branch
        %1566 = sbr.rel (%p1564) target = $region361
      $region360: #{tpu_custom_call.1} parent=5 // pred_region
        %s1567 = ssub.s32 %s28, 2
        // Predicated region
        $region362: #{tpu_custom_call.1} parent=360 // pred_check
          %p1568 = pneg %p228
        $region363: #{tpu_custom_call.1} parent=360 // pred_check_branch
          %1570 = sbr.rel (%p1568) target = $region365
        $region364: #{tpu_custom_call.1} parent=360 // pred_region
          %s1571 = sand.u32 %s213, 1
          %s1572 = scalar_lea.sflag [#allocation10], %s1571
          %s1573 = sand.u32 %s213, 1
          %s1574 = smul.addr %s1573, 8
          %s1575 = scalar_lea.vmem [#allocation9], %s1574
          %1576 = dma.done %s1572, 128
        $region365: #{tpu_custom_call.1} parent=360 // pred_fallthru
          _
      $region361: #{tpu_custom_call.1} parent=5 // pred_fallthru
        _
    $region6: #{tpu_custom_call.1} parent=1 // loop_footer
      %s32 = sadd.s32 1, %s28
    $region7: #{tpu_custom_call.1} parent=1 // loop_footer_branch
      %27 = sbr.rel target = $region3
    $region8: #{tpu_custom_call.1} parent=1 // loop_exit
      _
    %1577 = vsyncpa [#allocation10], 1
    %s1578 = scalar_lea.sflag [#allocation10], 1
    %1579 = vsyncpa %s1578, 1
    %1580 = vsyncpa [#allocation12], 1
  %1581 = vsyncmov [#allocation3]
  %s1582 = vpop.sfrf %1581
  %p1583 = scmp.eq.s32.totalorder %s1582, 0
  %p1584 = pneg %p1583
  %1586 = shalt.err (%p1584)
  %s1587 = scalar_lea.sflag [#allocation3], 1
  %1588 = vsyncmov %s1587
  %s1589 = vpop.sfrf %1588
  %p1590 = scmp.eq.s32.totalorder %s1589, 0
  %p1591 = pneg %p1590
  %1593 = shalt.err (%p1591)
  %s1594 = scalar_lea.sflag [#allocation3], 2
  %1595 = vsyncmov %s1594
  %s1596 = vpop.sfrf %1595
  %p1597 = scmp.eq.s32.totalorder %s1596, 0
  %p1598 = pneg %p1597
  %1600 = shalt.err (%p1598)
  %s1601 = scalar_lea.sflag [#allocation3], 3
  %1602 = vsyncmov %s1601
  %s1603 = vpop.sfrf %1602
  %p1604 = scmp.eq.s32.totalorder %s1603, 0
  %p1605 = pneg %p1604
  %1607 = shalt.err (%p1605)
  %s1608 = scalar_lea.sflag [#allocation3], 4
  %1609 = vsyncmov %s1608
  %s1610 = vpop.sfrf %1609
  %p1611 = scmp.eq.s32.totalorder %s1610, 0
  %p1612 = pneg %p1611
  %1614 = shalt.err (%p1612)
  %s1615 = scalar_lea.sflag [#allocation3], 5
  %1616 = vsyncmov %s1615
  %s1617 = vpop.sfrf %1616
  %p1618 = scmp.eq.s32.totalorder %s1617, 0
  %p1619 = pneg %p1618
  %1621 = shalt.err (%p1619)
  %s1622 = scalar_lea.sflag [#allocation3], 6
  %1623 = vsyncmov %s1622
  %s1624 = vpop.sfrf %1623
  %p1625 = scmp.eq.s32.totalorder %s1624, 0
  %p1626 = pneg %p1625
  %1628 = shalt.err (%p1626)
  %s1629 = scalar_lea.sflag [#allocation3], 7
  %1630 = vsyncmov %s1629
  %s1631 = vpop.sfrf %1630
  %p1632 = scmp.eq.s32.totalorder %s1631, 0
  %p1633 = pneg %p1632
  %1635 = shalt.err (%p1633)

</llo_original>
